<compile_context>
chip_gen: v6e
topology: v6e:2x2x1
jax: 0.10.0
libtpu: 0.0.40
codegen_flags: <defaults>
</compile_context>

<pallas_src>
import functools
import math

import jax
import jax.numpy as jnp
import numpy as np
from jax.experimental import pallas as pl
from jax.experimental.pallas import tpu as pltpu


def _lstm_fused_kernel(x_ref, mask_ref, wih_ref, whh_ref,
                       out_ref, h_out_ref, c_out_ref,
                       gx_sc, act_sc, *, t_steps, num_layers, dim, batch):
    """All layers + all timesteps in one invocation (everything VMEM-resident).

    x_ref    : (T*B, D)   bf16  time-major flattened input activations
    mask_ref : (T*B, D)   f32   1.0 where t < length[b], else 0.0
    wih_ref  : (L, D, 4D) bf16  input-hidden weights (transposed, gate cols [i,f,o,g])
    whh_ref  : (L, D, 4D) bf16  hidden-hidden weights, same layout
    out_ref  : (T*B, D)   f32   last-layer outputs (zero at padded positions)
    h_out_ref, c_out_ref : (L, B, D) f32  final per-layer states
    gx_sc    : (T*B, 4D)  f32   hoisted input-projection buffer (reused per layer)
    act_sc   : (T*B, D)   bf16  inter-layer activation buffer
    """
    d = dim

    for layer in range(num_layers):
        src = x_ref if layer == 0 else act_sc
        is_last = layer == num_layers - 1

        # Hoisted input projection: one bf16 MXU matmul over all timesteps.
        # (Safe to later overwrite act_sc: gx is materialized before the loop.)
        gx_sc[...] = jnp.dot(src[...], wih_ref[layer],
                             preferred_element_type=jnp.float32)

        whh = whh_ref[layer]                        # (D, 4D) bf16, loaded once

        def step(t, carry, is_last=is_last, whh=whh):
            h, c = carry                            # (B, D) f32
            row = pl.multiple_of(t * batch, batch)  # sublane-aligned slice start

            # Recurrent part only: gates_x[t] + h @ W_hh^T  ->  (B, 4D) f32
            gates = gx_sc[pl.ds(row, batch), :] + jnp.dot(
                h.astype(jnp.bfloat16), whh, preferred_element_type=jnp.float32)

            # Gate columns are [i, f, o, g]: one sigmoid over a contiguous 3D
            # slice, one tanh over the last D.
            sig = jax.nn.sigmoid(gates[:, :3 * d])
            i_g = sig[:, :d]
            f_g = sig[:, d:2 * d]
            o_g = sig[:, 2 * d:3 * d]
            g_g = jnp.tanh(gates[:, 3 * d:])

            c_new = f_g * c + i_g * g_g
            h_new = o_g * jnp.tanh(c_new)

            # Packed-sequence masking via the precomputed table:
            # freeze state at t >= length[b], zero padded output positions.
            m = mask_ref[pl.ds(row, batch), :] > 0.0
            h_next = jnp.where(m, h_new, h)
            c_next = jnp.where(m, c_new, c)
            out_val = jnp.where(m, h_new, 0.0)

            if is_last:
                out_ref[pl.ds(row, batch), :] = out_val.astype(out_ref.dtype)
            else:
                act_sc[pl.ds(row, batch), :] = out_val.astype(act_sc.dtype)
            return (h_next, c_next)

        h0 = jnp.zeros((batch, d), jnp.float32)
        c0 = jnp.zeros((batch, d), jnp.float32)
        h_fin, c_fin = jax.lax.fori_loop(0, t_steps, step, (h0, c0),
                                         unroll=min(t_steps, 8))

        # Final states written once per layer.
        h_out_ref[layer] = h_fin.astype(h_out_ref.dtype)
        c_out_ref[layer] = c_fin.astype(c_out_ref.dtype)


def _run_lstm_fused(x_flat, mask_flat, wih_stack, whh_stack, *, t_steps, batch):
    """x_flat: (T*B, D) bf16; mask_flat: (T*B, D) f32; weights: (L, D, 4D) bf16."""
    TB, D = mask_flat.shape
    L = wih_stack.shape[0]
    kernel = functools.partial(_lstm_fused_kernel, t_steps=t_steps,
                               num_layers=L, dim=D, batch=batch)

    cost = pl.CostEstimate(
        flops=int(2 * L * 2 * TB * D * (4 * D)),          # input-proj + hidden-proj
        transcendentals=int(5 * L * TB * D),              # 3 sigmoid + 2 tanh lanes
        bytes_accessed=int(2 * TB * D + 4 * TB * D        # x (bf16) + mask (f32)
                           + 2 * 2 * L * D * 4 * D        # weight stacks (bf16)
                           + 4 * TB * D                   # last-layer outputs
                           + 2 * 4 * L * batch * D),      # final h/c
    )

    return pl.pallas_call(
        kernel,
        out_shape=(
            jax.ShapeDtypeStruct((TB, D), jnp.float32),       # last-layer outputs
            jax.ShapeDtypeStruct((L, batch, D), jnp.float32),  # final h per layer
            jax.ShapeDtypeStruct((L, batch, D), jnp.float32),  # final c per layer
        ),
        grid_spec=pltpu.PrefetchScalarGridSpec(
            num_scalar_prefetch=0,
            grid=(1,),                                        # everything resident
            in_specs=[
                pl.BlockSpec((TB, D), lambda i: (0, 0)),           # x (flattened, bf16)
                pl.BlockSpec((TB, D), lambda i: (0, 0)),           # mask table
                pl.BlockSpec((L, D, 4 * D), lambda i: (0, 0, 0)),  # W_ih^T stacked
                pl.BlockSpec((L, D, 4 * D), lambda i: (0, 0, 0)),  # W_hh^T stacked
            ],
            out_specs=[
                pl.BlockSpec((TB, D), lambda i: (0, 0)),
                pl.BlockSpec((L, batch, D), lambda i: (0, 0, 0)),
                pl.BlockSpec((L, batch, D), lambda i: (0, 0, 0)),
            ],
            scratch_shapes=[
                pltpu.VMEM((TB, 4 * D), jnp.float32),    # hoisted gates_x buffer
                pltpu.VMEM((TB, D), jnp.bfloat16),       # inter-layer activations
            ],
        ),
        compiler_params=pltpu.CompilerParams(
            dimension_semantics=("arbitrary",),
            vmem_limit_bytes=32 * 1024 * 1024,
        ),
        cost_estimate=cost,
    )(x_flat, mask_flat, wih_stack, whh_stack)


def _prep_weight(w):
    """(4D, D) PyTorch rows [i,f,g,o] -> (D, 4D) transposed bf16, cols reordered [i,f,o,g]."""
    w_t = jnp.asarray(w, jnp.float32).T                    # (D, 4D), cols [i, f, g, o]
    d = w_t.shape[0]
    w_r = jnp.concatenate(
        [w_t[:, :2 * d], w_t[:, 3 * d:], w_t[:, 2 * d:3 * d]], axis=1)
    return w_r.astype(jnp.bfloat16)


def lstm_source_forward(embedding, lengths, weights):
    """embedding: (B, T, D) f32 (batch_first). lengths: (B,) int valid lengths.
    weights: list of (w_ih, w_hh) per layer, each (4D, D) PyTorch layout [i,f,g,o].
    Returns (context (B, T_out, D), h (L, B, D), c (L, B, D)), T_out = max(lengths)."""
    # nn.Dropout in eval mode is identity.
    B, T, D = embedding.shape
    lengths_np = np.asarray(lengths).astype(np.int32)
    t_out = int(lengths_np.max())

    b_pad = ((max(B, 8) + 7) // 8) * 8       # sublane-aligned batch
    t_pad = ((t_out + 7) // 8) * 8           # bucketed timestep count (recompile-stable)

    # Time-major, zero-padded to (t_pad, b_pad, D); bf16 activations for the MXU.
    x = jnp.transpose(embedding, (1, 0, 2)).astype(jnp.float32)
    x = x[:t_pad]
    x = jnp.pad(x, ((0, t_pad - x.shape[0]), (0, b_pad - B), (0, 0)))
    x_flat = x.reshape(t_pad * b_pad, D).astype(jnp.bfloat16)

    # Valid-length mask table built once: mask[t, b, :] = 1.0 iff t < length[b].
    len_pad = np.zeros((b_pad,), np.int32)
    len_pad[:B] = lengths_np
    mask_np = (np.arange(t_pad)[:, None] < len_pad[None, :]).astype(np.float32)
    mask_flat = jnp.asarray(
        np.broadcast_to(mask_np[:, :, None], (t_pad, b_pad, D))
        .reshape(t_pad * b_pad, D))

    wih_stack = jnp.stack([_prep_weight(w_ih) for (w_ih, _) in weights])  # (L, D, 4D)
    whh_stack = jnp.stack([_prep_weight(w_hh) for (_, w_hh) in weights])  # (L, D, 4D)

    out_flat, h_stack, c_stack = _run_lstm_fused(
        x_flat, mask_flat, wih_stack, whh_stack, t_steps=t_pad, batch=b_pad)

    context = jnp.transpose(
        out_flat.reshape(t_pad, b_pad, D), (1, 0, 2))[:B, :t_out]          # (B, t_out, D)
    return context, h_stack[:, :B], c_stack[:, :B]


def _lstm_ref_jax(embedding, lengths, weights):
    """Pure-JAX f32 reference (lax.scan) mirroring packed-sequence LSTM semantics."""
    B, T, D = embedding.shape
    lengths = jnp.asarray(lengths, jnp.int32)
    x = jnp.transpose(embedding, (1, 0, 2)).astype(jnp.float32)
    h_list, c_list = [], []
    layer_in = x
    for (w_ih, w_hh) in weights:
        w_ih = jnp.asarray(w_ih, jnp.float32)
        w_hh = jnp.asarray(w_hh, jnp.float32)

        def step(carry, inp):
            h, c = carry
            xt, t = inp
            g = xt @ w_ih.T + h @ w_hh.T
            i = jax.nn.sigmoid(g[:, :D])
            f = jax.nn.sigmoid(g[:, D:2 * D])
            gg = jnp.tanh(g[:, 2 * D:3 * D])
            o = jax.nn.sigmoid(g[:, 3 * D:])
            c_n = f * c + i * gg
            h_n = o * jnp.tanh(c_n)
            m = (lengths > t)[:, None]
            h2 = jnp.where(m, h_n, h)
            c2 = jnp.where(m, c_n, c)
            out = jnp.where(m, h_n, 0.0)
            return (h2, c2), out

        (hf, cf), outs = jax.lax.scan(
            step, (jnp.zeros((B, D)), jnp.zeros((B, D))),
            (layer_in, jnp.arange(T, dtype=jnp.int32)))
        h_list.append(hf)
        c_list.append(cf)
        layer_in = outs
    t_out = int(np.asarray(lengths).max())
    return (jnp.transpose(layer_in, (1, 0, 2))[:, :t_out, :],
            jnp.stack(h_list), jnp.stack(c_list))


if __name__ == "__main__":
    # params.dimension = 32, params.layers = 2
    B, T, D, L = 4, 8, 32, 2
    key = jax.random.PRNGKey(0)
    k_emb, *k_w = jax.random.split(key, 1 + 2 * L)

    embedding = jax.random.normal(k_emb, (B, T, D), dtype=jnp.float32)
    lengths = np.array([7, 5, 3, 6], dtype=np.int32)

    # PyTorch nn.LSTM init: U(-1/sqrt(hidden), 1/sqrt(hidden)); gate order [i, f, g, o].
    bound = 1.0 / math.sqrt(D)
    weights = []
    for l in range(L):
        w_ih = jax.random.uniform(k_w[2 * l], (4 * D, D), minval=-bound, maxval=bound)
        w_hh = jax.random.uniform(k_w[2 * l + 1], (4 * D, D), minval=-bound, maxval=bound)
        weights.append((w_ih, w_hh))

    context, h, c = lstm_source_forward(embedding, lengths, weights)
    jax.block_until_ready((context, h, c))

    # Sanity-check against the pure-JAX f32 reference (kernel uses bf16 MXU
    # operands with f32 accumulation -> loosened tolerance).
    ctx_ref, h_ref, c_ref = _lstm_ref_jax(embedding, lengths, weights)
    np.testing.assert_allclose(np.asarray(context), np.asarray(ctx_ref), rtol=5e-2, atol=2e-2)
    np.testing.assert_allclose(np.asarray(h), np.asarray(h_ref), rtol=5e-2, atol=2e-2)
    np.testing.assert_allclose(np.asarray(c), np.asarray(c_ref), rtol=5e-2, atol=2e-2)

    assert context.shape == (B, int(lengths.max()), D)
    assert h.shape == (L, B, D) and c.shape == (L, B, D)
    print("KERNEL_OK")
</pallas_src>

<mosaic_0001>
module attributes {stable_mosaic.version = 11 : i64} {
  func.func @_lstm_fused_kernel(%arg0: i32, %arg1: memref<64x32xbf16, #tpu.memory_space<vmem>>, %arg2: memref<64x32xf32, #tpu.memory_space<vmem>>, %arg3: memref<2x32x128xbf16, #tpu.memory_space<vmem>>, %arg4: memref<2x32x128xbf16, #tpu.memory_space<vmem>>, %arg5: memref<64x32xf32, #tpu.memory_space<vmem>>, %arg6: memref<2x8x32xf32, #tpu.memory_space<vmem>>, %arg7: memref<2x8x32xf32, #tpu.memory_space<vmem>>, %arg8: memref<64x128xf32, #tpu.memory_space<vmem>>, %arg9: memref<64x32xbf16, #tpu.memory_space<vmem>>) attributes {dimension_semantics = [#tpu.dimension_semantics<arbitrary>], iteration_bounds = array<i64: 1>, scalar_prefetch = 0 : i64, scratch_operands = 2 : i64, tpu.core_type = #tpu.core_type<tc>, window_params = [{pipeline_mode = #tpu.pipeline_mode<synchronous>, transform_indices = @transform_0, window_bounds = array<i64: 64, 32>}, {pipeline_mode = #tpu.pipeline_mode<synchronous>, transform_indices = @transform_1, window_bounds = array<i64: 64, 32>}, {pipeline_mode = #tpu.pipeline_mode<synchronous>, transform_indices = @transform_2, window_bounds = array<i64: 2, 32, 128>}, {pipeline_mode = #tpu.pipeline_mode<synchronous>, transform_indices = @transform_3, window_bounds = array<i64: 2, 32, 128>}, {pipeline_mode = #tpu.pipeline_mode<synchronous>, transform_indices = @transform_4, window_bounds = array<i64: 64, 32>}, {pipeline_mode = #tpu.pipeline_mode<synchronous>, transform_indices = @transform_5, window_bounds = array<i64: 2, 8, 32>}, {pipeline_mode = #tpu.pipeline_mode<synchronous>, transform_indices = @transform_6, window_bounds = array<i64: 2, 8, 32>}]} {
    %c0 = arith.constant 0 : index
    %c0_0 = arith.constant 0 : index
    %0 = vector.load %arg1[%c0, %c0_0] : memref<64x32xbf16, #tpu.memory_space<vmem>>, vector<64x32xbf16>
    %c0_1 = arith.constant 0 : index
    %c0_2 = arith.constant 0 : index
    %c0_3 = arith.constant 0 : index
    %1 = vector.load %arg3[%c0_1, %c0_2, %c0_3] : memref<2x32x128xbf16, #tpu.memory_space<vmem>>, vector<1x32x128xbf16>
    %2 = vector.shape_cast %1 : vector<1x32x128xbf16> to vector<32x128xbf16>
    %cst = arith.constant dense<0.000000e+00> : vector<64x128xf32>
    %3 = tpu.matmul %0, %2, %cst {dimension_numbers = #tpu.dot_dimension_numbers<[1], [0], [0], [1], [0, 0, 1, 1], [], []>} : vector<64x32xbf16>, vector<32x128xbf16>, vector<64x128xf32> -> vector<64x128xf32>
    %c0_4 = arith.constant 0 : index
    %c0_5 = arith.constant 0 : index
    %4 = vector.load %arg8[%c0_4, %c0_5] : memref<64x128xf32, #tpu.memory_space<vmem>>, vector<64x128xf32>
    tpu.vector_store %arg8[%c0_4, %c0_5], %3 {strides = array<i32>} : memref<64x128xf32, #tpu.memory_space<vmem>>, vector<64x128xf32>,
    %c0_6 = arith.constant 0 : index
    %c0_7 = arith.constant 0 : index
    %c0_8 = arith.constant 0 : index
    %5 = vector.load %arg4[%c0_6, %c0_7, %c0_8] : memref<2x32x128xbf16, #tpu.memory_space<vmem>>, vector<1x32x128xbf16>
    %6 = vector.shape_cast %5 : vector<1x32x128xbf16> to vector<32x128xbf16>
    %cst_9 = arith.constant 0.000000e+00 : f32
    %7 = vector.broadcast %cst_9 : f32 to vector<8x32xf32>
    %cst_10 = arith.constant 0.000000e+00 : f32
    %8 = vector.broadcast %cst_10 : f32 to vector<8x32xf32>
    %c0_i32 = arith.constant 0 : i32
    %c8_i32 = arith.constant 8 : i32
    %9 = arith.muli %c0_i32, %c8_i32 : i32
    %10 = tpu.assume_multiple %9, 8 : i32
    %11 = arith.index_cast %10 : i32 to index
    %c0_11 = arith.constant 0 : index
    %12 = vector.load %arg8[%11, %c0_11] : memref<64x128xf32, #tpu.memory_space<vmem>>, vector<8x128xf32>
    %13 = arith.truncf %7 : vector<8x32xf32> to vector<8x32xbf16>
    %cst_12 = arith.constant dense<0.000000e+00> : vector<8x128xf32>
    %14 = tpu.matmul %13, %6, %cst_12 {dimension_numbers = #tpu.dot_dimension_numbers<[1], [0], [0], [1], [0, 0, 1, 1], [], []>} : vector<8x32xbf16>, vector<32x128xbf16>, vector<8x128xf32> -> vector<8x128xf32>
    %15 = arith.addf %12, %14 : vector<8x128xf32>
    %16 = vector.extract_strided_slice %15 {offsets = [0, 0], sizes = [8, 96], strides = [1, 1]} : vector<8x128xf32> to vector<8x96xf32>
    %17 = arith.negf %16 : vector<8x96xf32>
    %18 = math.exp %17 : vector<8x96xf32>
    %cst_13 = arith.constant 1.000000e+00 : f32
    %19 = vector.broadcast %cst_13 : f32 to vector<8x96xf32>
    %20 = arith.addf %19, %18 : vector<8x96xf32>
    %21 = arith.divf %19, %20 : vector<8x96xf32>
    %22 = vector.extract_strided_slice %21 {offsets = [0, 0], sizes = [8, 32], strides = [1, 1]} : vector<8x96xf32> to vector<8x32xf32>
    %23 = vector.extract_strided_slice %21 {offsets = [0, 32], sizes = [8, 32], strides = [1, 1]} : vector<8x96xf32> to vector<8x32xf32>
    %24 = vector.extract_strided_slice %21 {offsets = [0, 64], sizes = [8, 32], strides = [1, 1]} : vector<8x96xf32> to vector<8x32xf32>
    %25 = vector.extract_strided_slice %15 {offsets = [0, 96], sizes = [8, 32], strides = [1, 1]} : vector<8x128xf32> to vector<8x32xf32>
    %26 = math.tanh %25 : vector<8x32xf32>
    %27 = arith.mulf %23, %8 : vector<8x32xf32>
    %28 = arith.mulf %22, %26 : vector<8x32xf32>
    %29 = arith.addf %27, %28 : vector<8x32xf32>
    %30 = math.tanh %29 : vector<8x32xf32>
    %31 = arith.mulf %24, %30 : vector<8x32xf32>
    %32 = arith.index_cast %10 : i32 to index
    %c0_14 = arith.constant 0 : index
    %33 = vector.load %arg2[%32, %c0_14] : memref<64x32xf32, #tpu.memory_space<vmem>>, vector<8x32xf32>
    %cst_15 = arith.constant 0.000000e+00 : f32
    %34 = vector.broadcast %cst_15 : f32 to vector<8x32xf32>
    %35 = arith.cmpf ogt, %33, %34 : vector<8x32xf32>
    %36 = arith.select %35, %31, %7 : vector<8x32xi1>, vector<8x32xf32>
    %37 = arith.select %35, %29, %8 : vector<8x32xi1>, vector<8x32xf32>
    %cst_16 = arith.constant 0.000000e+00 : f32
    %38 = vector.broadcast %cst_16 : f32 to vector<8x32xf32>
    %39 = arith.select %35, %31, %38 : vector<8x32xi1>, vector<8x32xf32>
    %40 = arith.truncf %39 : vector<8x32xf32> to vector<8x32xbf16>
    %41 = arith.index_cast %10 : i32 to index
    %c0_17 = arith.constant 0 : index
    %42 = vector.load %arg9[%41, %c0_17] : memref<64x32xbf16, #tpu.memory_space<vmem>>, vector<8x32xbf16>
    tpu.vector_store %arg9[%41, %c0_17], %40 {strides = array<i32>} : memref<64x32xbf16, #tpu.memory_space<vmem>>, vector<8x32xbf16>,
    %c1_i32 = arith.constant 1 : i32
    %c8_i32_18 = arith.constant 8 : i32
    %43 = arith.muli %c1_i32, %c8_i32_18 : i32
    %44 = tpu.assume_multiple %43, 8 : i32
    %45 = arith.index_cast %44 : i32 to index
    %c0_19 = arith.constant 0 : index
    %46 = vector.load %arg8[%45, %c0_19] : memref<64x128xf32, #tpu.memory_space<vmem>>, vector<8x128xf32>
    %47 = arith.truncf %36 : vector<8x32xf32> to vector<8x32xbf16>
    %cst_20 = arith.constant dense<0.000000e+00> : vector<8x128xf32>
    %48 = tpu.matmul %47, %6, %cst_20 {dimension_numbers = #tpu.dot_dimension_numbers<[1], [0], [0], [1], [0, 0, 1, 1], [], []>} : vector<8x32xbf16>, vector<32x128xbf16>, vector<8x128xf32> -> vector<8x128xf32>
    %49 = arith.addf %46, %48 : vector<8x128xf32>
    %50 = vector.extract_strided_slice %49 {offsets = [0, 0], sizes = [8, 96], strides = [1, 1]} : vector<8x128xf32> to vector<8x96xf32>
    %51 = arith.negf %50 : vector<8x96xf32>
    %52 = math.exp %51 : vector<8x96xf32>
    %cst_21 = arith.constant 1.000000e+00 : f32
    %53 = vector.broadcast %cst_21 : f32 to vector<8x96xf32>
    %54 = arith.addf %53, %52 : vector<8x96xf32>
    %55 = arith.divf %53, %54 : vector<8x96xf32>
    %56 = vector.extract_strided_slice %55 {offsets = [0, 0], sizes = [8, 32], strides = [1, 1]} : vector<8x96xf32> to vector<8x32xf32>
    %57 = vector.extract_strided_slice %55 {offsets = [0, 32], sizes = [8, 32], strides = [1, 1]} : vector<8x96xf32> to vector<8x32xf32>
    %58 = vector.extract_strided_slice %55 {offsets = [0, 64], sizes = [8, 32], strides = [1, 1]} : vector<8x96xf32> to vector<8x32xf32>
    %59 = vector.extract_strided_slice %49 {offsets = [0, 96], sizes = [8, 32], strides = [1, 1]} : vector<8x128xf32> to vector<8x32xf32>
    %60 = math.tanh %59 : vector<8x32xf32>
    %61 = arith.mulf %57, %37 : vector<8x32xf32>
    %62 = arith.mulf %56, %60 : vector<8x32xf32>
    %63 = arith.addf %61, %62 : vector<8x32xf32>
    %64 = math.tanh %63 : vector<8x32xf32>
    %65 = arith.mulf %58, %64 : vector<8x32xf32>
    %66 = arith.index_cast %44 : i32 to index
    %c0_22 = arith.constant 0 : index
    %67 = vector.load %arg2[%66, %c0_22] : memref<64x32xf32, #tpu.memory_space<vmem>>, vector<8x32xf32>
    %cst_23 = arith.constant 0.000000e+00 : f32
    %68 = vector.broadcast %cst_23 : f32 to vector<8x32xf32>
    %69 = arith.cmpf ogt, %67, %68 : vector<8x32xf32>
    %70 = arith.select %69, %65, %36 : vector<8x32xi1>, vector<8x32xf32>
    %71 = arith.select %69, %63, %37 : vector<8x32xi1>, vector<8x32xf32>
    %cst_24 = arith.constant 0.000000e+00 : f32
    %72 = vector.broadcast %cst_24 : f32 to vector<8x32xf32>
    %73 = arith.select %69, %65, %72 : vector<8x32xi1>, vector<8x32xf32>
    %74 = arith.truncf %73 : vector<8x32xf32> to vector<8x32xbf16>
    %75 = arith.index_cast %44 : i32 to index
    %c0_25 = arith.constant 0 : index
    %76 = vector.load %arg9[%75, %c0_25] : memref<64x32xbf16, #tpu.memory_space<vmem>>, vector<8x32xbf16>
    tpu.vector_store %arg9[%75, %c0_25], %74 {strides = array<i32>} : memref<64x32xbf16, #tpu.memory_space<vmem>>, vector<8x32xbf16>,
    %c2_i32 = arith.constant 2 : i32
    %c8_i32_26 = arith.constant 8 : i32
    %77 = arith.muli %c2_i32, %c8_i32_26 : i32
    %78 = tpu.assume_multiple %77, 8 : i32
    %79 = arith.index_cast %78 : i32 to index
    %c0_27 = arith.constant 0 : index
    %80 = vector.load %arg8[%79, %c0_27] : memref<64x128xf32, #tpu.memory_space<vmem>>, vector<8x128xf32>
    %81 = arith.truncf %70 : vector<8x32xf32> to vector<8x32xbf16>
    %cst_28 = arith.constant dense<0.000000e+00> : vector<8x128xf32>
    %82 = tpu.matmul %81, %6, %cst_28 {dimension_numbers = #tpu.dot_dimension_numbers<[1], [0], [0], [1], [0, 0, 1, 1], [], []>} : vector<8x32xbf16>, vector<32x128xbf16>, vector<8x128xf32> -> vector<8x128xf32>
    %83 = arith.addf %80, %82 : vector<8x128xf32>
    %84 = vector.extract_strided_slice %83 {offsets = [0, 0], sizes = [8, 96], strides = [1, 1]} : vector<8x128xf32> to vector<8x96xf32>
    %85 = arith.negf %84 : vector<8x96xf32>
    %86 = math.exp %85 : vector<8x96xf32>
    %cst_29 = arith.constant 1.000000e+00 : f32
    %87 = vector.broadcast %cst_29 : f32 to vector<8x96xf32>
    %88 = arith.addf %87, %86 : vector<8x96xf32>
    %89 = arith.divf %87, %88 : vector<8x96xf32>
    %90 = vector.extract_strided_slice %89 {offsets = [0, 0], sizes = [8, 32], strides = [1, 1]} : vector<8x96xf32> to vector<8x32xf32>
    %91 = vector.extract_strided_slice %89 {offsets = [0, 32], sizes = [8, 32], strides = [1, 1]} : vector<8x96xf32> to vector<8x32xf32>
    %92 = vector.extract_strided_slice %89 {offsets = [0, 64], sizes = [8, 32], strides = [1, 1]} : vector<8x96xf32> to vector<8x32xf32>
    %93 = vector.extract_strided_slice %83 {offsets = [0, 96], sizes = [8, 32], strides = [1, 1]} : vector<8x128xf32> to vector<8x32xf32>
    %94 = math.tanh %93 : vector<8x32xf32>
    %95 = arith.mulf %91, %71 : vector<8x32xf32>
    %96 = arith.mulf %90, %94 : vector<8x32xf32>
    %97 = arith.addf %95, %96 : vector<8x32xf32>
    %98 = math.tanh %97 : vector<8x32xf32>
    %99 = arith.mulf %92, %98 : vector<8x32xf32>
    %100 = arith.index_cast %78 : i32 to index
    %c0_30 = arith.constant 0 : index
    %101 = vector.load %arg2[%100, %c0_30] : memref<64x32xf32, #tpu.memory_space<vmem>>, vector<8x32xf32>
    %cst_31 = arith.constant 0.000000e+00 : f32
    %102 = vector.broadcast %cst_31 : f32 to vector<8x32xf32>
    %103 = arith.cmpf ogt, %101, %102 : vector<8x32xf32>
    %104 = arith.select %103, %99, %70 : vector<8x32xi1>, vector<8x32xf32>
    %105 = arith.select %103, %97, %71 : vector<8x32xi1>, vector<8x32xf32>
    %cst_32 = arith.constant 0.000000e+00 : f32
    %106 = vector.broadcast %cst_32 : f32 to vector<8x32xf32>
    %107 = arith.select %103, %99, %106 : vector<8x32xi1>, vector<8x32xf32>
    %108 = arith.truncf %107 : vector<8x32xf32> to vector<8x32xbf16>
    %109 = arith.index_cast %78 : i32 to index
    %c0_33 = arith.constant 0 : index
    %110 = vector.load %arg9[%109, %c0_33] : memref<64x32xbf16, #tpu.memory_space<vmem>>, vector<8x32xbf16>
    tpu.vector_store %arg9[%109, %c0_33], %108 {strides = array<i32>} : memref<64x32xbf16, #tpu.memory_space<vmem>>, vector<8x32xbf16>,
    %c3_i32 = arith.constant 3 : i32
    %c8_i32_34 = arith.constant 8 : i32
    %111 = arith.muli %c3_i32, %c8_i32_34 : i32
    %112 = tpu.assume_multiple %111, 8 : i32
    %113 = arith.index_cast %112 : i32 to index
    %c0_35 = arith.constant 0 : index
    %114 = vector.load %arg8[%113, %c0_35] : memref<64x128xf32, #tpu.memory_space<vmem>>, vector<8x128xf32>
    %115 = arith.truncf %104 : vector<8x32xf32> to vector<8x32xbf16>
    %cst_36 = arith.constant dense<0.000000e+00> : vector<8x128xf32>
    %116 = tpu.matmul %115, %6, %cst_36 {dimension_numbers = #tpu.dot_dimension_numbers<[1], [0], [0], [1], [0, 0, 1, 1], [], []>} : vector<8x32xbf16>, vector<32x128xbf16>, vector<8x128xf32> -> vector<8x128xf32>
    %117 = arith.addf %114, %116 : vector<8x128xf32>
    %118 = vector.extract_strided_slice %117 {offsets = [0, 0], sizes = [8, 96], strides = [1, 1]} : vector<8x128xf32> to vector<8x96xf32>
    %119 = arith.negf %118 : vector<8x96xf32>
    %120 = math.exp %119 : vector<8x96xf32>
    %cst_37 = arith.constant 1.000000e+00 : f32
    %121 = vector.broadcast %cst_37 : f32 to vector<8x96xf32>
    %122 = arith.addf %121, %120 : vector<8x96xf32>
    %123 = arith.divf %121, %122 : vector<8x96xf32>
    %124 = vector.extract_strided_slice %123 {offsets = [0, 0], sizes = [8, 32], strides = [1, 1]} : vector<8x96xf32> to vector<8x32xf32>
    %125 = vector.extract_strided_slice %123 {offsets = [0, 32], sizes = [8, 32], strides = [1, 1]} : vector<8x96xf32> to vector<8x32xf32>
    %126 = vector.extract_strided_slice %123 {offsets = [0, 64], sizes = [8, 32], strides = [1, 1]} : vector<8x96xf32> to vector<8x32xf32>
    %127 = vector.extract_strided_slice %117 {offsets = [0, 96], sizes = [8, 32], strides = [1, 1]} : vector<8x128xf32> to vector<8x32xf32>
    %128 = math.tanh %127 : vector<8x32xf32>
    %129 = arith.mulf %125, %105 : vector<8x32xf32>
    %130 = arith.mulf %124, %128 : vector<8x32xf32>
    %131 = arith.addf %129, %130 : vector<8x32xf32>
    %132 = math.tanh %131 : vector<8x32xf32>
    %133 = arith.mulf %126, %132 : vector<8x32xf32>
    %134 = arith.index_cast %112 : i32 to index
    %c0_38 = arith.constant 0 : index
    %135 = vector.load %arg2[%134, %c0_38] : memref<64x32xf32, #tpu.memory_space<vmem>>, vector<8x32xf32>
    %cst_39 = arith.constant 0.000000e+00 : f32
    %136 = vector.broadcast %cst_39 : f32 to vector<8x32xf32>
    %137 = arith.cmpf ogt, %135, %136 : vector<8x32xf32>
    %138 = arith.select %137, %133, %104 : vector<8x32xi1>, vector<8x32xf32>
    %139 = arith.select %137, %131, %105 : vector<8x32xi1>, vector<8x32xf32>
    %cst_40 = arith.constant 0.000000e+00 : f32
    %140 = vector.broadcast %cst_40 : f32 to vector<8x32xf32>
    %141 = arith.select %137, %133, %140 : vector<8x32xi1>, vector<8x32xf32>
    %142 = arith.truncf %141 : vector<8x32xf32> to vector<8x32xbf16>
    %143 = arith.index_cast %112 : i32 to index
    %c0_41 = arith.constant 0 : index
    %144 = vector.load %arg9[%143, %c0_41] : memref<64x32xbf16, #tpu.memory_space<vmem>>, vector<8x32xbf16>
    tpu.vector_store %arg9[%143, %c0_41], %142 {strides = array<i32>} : memref<64x32xbf16, #tpu.memory_space<vmem>>, vector<8x32xbf16>,
    %c4_i32 = arith.constant 4 : i32
    %c8_i32_42 = arith.constant 8 : i32
    %145 = arith.muli %c4_i32, %c8_i32_42 : i32
    %146 = tpu.assume_multiple %145, 8 : i32
    %147 = arith.index_cast %146 : i32 to index
    %c0_43 = arith.constant 0 : index
    %148 = vector.load %arg8[%147, %c0_43] : memref<64x128xf32, #tpu.memory_space<vmem>>, vector<8x128xf32>
    %149 = arith.truncf %138 : vector<8x32xf32> to vector<8x32xbf16>
    %cst_44 = arith.constant dense<0.000000e+00> : vector<8x128xf32>
    %150 = tpu.matmul %149, %6, %cst_44 {dimension_numbers = #tpu.dot_dimension_numbers<[1], [0], [0], [1], [0, 0, 1, 1], [], []>} : vector<8x32xbf16>, vector<32x128xbf16>, vector<8x128xf32> -> vector<8x128xf32>
    %151 = arith.addf %148, %150 : vector<8x128xf32>
    %152 = vector.extract_strided_slice %151 {offsets = [0, 0], sizes = [8, 96], strides = [1, 1]} : vector<8x128xf32> to vector<8x96xf32>
    %153 = arith.negf %152 : vector<8x96xf32>
    %154 = math.exp %153 : vector<8x96xf32>
    %cst_45 = arith.constant 1.000000e+00 : f32
    %155 = vector.broadcast %cst_45 : f32 to vector<8x96xf32>
    %156 = arith.addf %155, %154 : vector<8x96xf32>
    %157 = arith.divf %155, %156 : vector<8x96xf32>
    %158 = vector.extract_strided_slice %157 {offsets = [0, 0], sizes = [8, 32], strides = [1, 1]} : vector<8x96xf32> to vector<8x32xf32>
    %159 = vector.extract_strided_slice %157 {offsets = [0, 32], sizes = [8, 32], strides = [1, 1]} : vector<8x96xf32> to vector<8x32xf32>
    %160 = vector.extract_strided_slice %157 {offsets = [0, 64], sizes = [8, 32], strides = [1, 1]} : vector<8x96xf32> to vector<8x32xf32>
    %161 = vector.extract_strided_slice %151 {offsets = [0, 96], sizes = [8, 32], strides = [1, 1]} : vector<8x128xf32> to vector<8x32xf32>
    %162 = math.tanh %161 : vector<8x32xf32>
    %163 = arith.mulf %159, %139 : vector<8x32xf32>
    %164 = arith.mulf %158, %162 : vector<8x32xf32>
    %165 = arith.addf %163, %164 : vector<8x32xf32>
    %166 = math.tanh %165 : vector<8x32xf32>
    %167 = arith.mulf %160, %166 : vector<8x32xf32>
    %168 = arith.index_cast %146 : i32 to index
    %c0_46 = arith.constant 0 : index
    %169 = vector.load %arg2[%168, %c0_46] : memref<64x32xf32, #tpu.memory_space<vmem>>, vector<8x32xf32>
    %cst_47 = arith.constant 0.000000e+00 : f32
    %170 = vector.broadcast %cst_47 : f32 to vector<8x32xf32>
    %171 = arith.cmpf ogt, %169, %170 : vector<8x32xf32>
    %172 = arith.select %171, %167, %138 : vector<8x32xi1>, vector<8x32xf32>
    %173 = arith.select %171, %165, %139 : vector<8x32xi1>, vector<8x32xf32>
    %cst_48 = arith.constant 0.000000e+00 : f32
    %174 = vector.broadcast %cst_48 : f32 to vector<8x32xf32>
    %175 = arith.select %171, %167, %174 : vector<8x32xi1>, vector<8x32xf32>
    %176 = arith.truncf %175 : vector<8x32xf32> to vector<8x32xbf16>
    %177 = arith.index_cast %146 : i32 to index
    %c0_49 = arith.constant 0 : index
    %178 = vector.load %arg9[%177, %c0_49] : memref<64x32xbf16, #tpu.memory_space<vmem>>, vector<8x32xbf16>
    tpu.vector_store %arg9[%177, %c0_49], %176 {strides = array<i32>} : memref<64x32xbf16, #tpu.memory_space<vmem>>, vector<8x32xbf16>,
    %c5_i32 = arith.constant 5 : i32
    %c8_i32_50 = arith.constant 8 : i32
    %179 = arith.muli %c5_i32, %c8_i32_50 : i32
    %180 = tpu.assume_multiple %179, 8 : i32
    %181 = arith.index_cast %180 : i32 to index
    %c0_51 = arith.constant 0 : index
    %182 = vector.load %arg8[%181, %c0_51] : memref<64x128xf32, #tpu.memory_space<vmem>>, vector<8x128xf32>
    %183 = arith.truncf %172 : vector<8x32xf32> to vector<8x32xbf16>
    %cst_52 = arith.constant dense<0.000000e+00> : vector<8x128xf32>
    %184 = tpu.matmul %183, %6, %cst_52 {dimension_numbers = #tpu.dot_dimension_numbers<[1], [0], [0], [1], [0, 0, 1, 1], [], []>} : vector<8x32xbf16>, vector<32x128xbf16>, vector<8x128xf32> -> vector<8x128xf32>
    %185 = arith.addf %182, %184 : vector<8x128xf32>
    %186 = vector.extract_strided_slice %185 {offsets = [0, 0], sizes = [8, 96], strides = [1, 1]} : vector<8x128xf32> to vector<8x96xf32>
    %187 = arith.negf %186 : vector<8x96xf32>
    %188 = math.exp %187 : vector<8x96xf32>
    %cst_53 = arith.constant 1.000000e+00 : f32
    %189 = vector.broadcast %cst_53 : f32 to vector<8x96xf32>
    %190 = arith.addf %189, %188 : vector<8x96xf32>
    %191 = arith.divf %189, %190 : vector<8x96xf32>
    %192 = vector.extract_strided_slice %191 {offsets = [0, 0], sizes = [8, 32], strides = [1, 1]} : vector<8x96xf32> to vector<8x32xf32>
    %193 = vector.extract_strided_slice %191 {offsets = [0, 32], sizes = [8, 32], strides = [1, 1]} : vector<8x96xf32> to vector<8x32xf32>
    %194 = vector.extract_strided_slice %191 {offsets = [0, 64], sizes = [8, 32], strides = [1, 1]} : vector<8x96xf32> to vector<8x32xf32>
    %195 = vector.extract_strided_slice %185 {offsets = [0, 96], sizes = [8, 32], strides = [1, 1]} : vector<8x128xf32> to vector<8x32xf32>
    %196 = math.tanh %195 : vector<8x32xf32>
    %197 = arith.mulf %193, %173 : vector<8x32xf32>
    %198 = arith.mulf %192, %196 : vector<8x32xf32>
    %199 = arith.addf %197, %198 : vector<8x32xf32>
    %200 = math.tanh %199 : vector<8x32xf32>
    %201 = arith.mulf %194, %200 : vector<8x32xf32>
    %202 = arith.index_cast %180 : i32 to index
    %c0_54 = arith.constant 0 : index
    %203 = vector.load %arg2[%202, %c0_54] : memref<64x32xf32, #tpu.memory_space<vmem>>, vector<8x32xf32>
    %cst_55 = arith.constant 0.000000e+00 : f32
    %204 = vector.broadcast %cst_55 : f32 to vector<8x32xf32>
    %205 = arith.cmpf ogt, %203, %204 : vector<8x32xf32>
    %206 = arith.select %205, %201, %172 : vector<8x32xi1>, vector<8x32xf32>
    %207 = arith.select %205, %199, %173 : vector<8x32xi1>, vector<8x32xf32>
    %cst_56 = arith.constant 0.000000e+00 : f32
    %208 = vector.broadcast %cst_56 : f32 to vector<8x32xf32>
    %209 = arith.select %205, %201, %208 : vector<8x32xi1>, vector<8x32xf32>
    %210 = arith.truncf %209 : vector<8x32xf32> to vector<8x32xbf16>
    %211 = arith.index_cast %180 : i32 to index
    %c0_57 = arith.constant 0 : index
    %212 = vector.load %arg9[%211, %c0_57] : memref<64x32xbf16, #tpu.memory_space<vmem>>, vector<8x32xbf16>
    tpu.vector_store %arg9[%211, %c0_57], %210 {strides = array<i32>} : memref<64x32xbf16, #tpu.memory_space<vmem>>, vector<8x32xbf16>,
    %c6_i32 = arith.constant 6 : i32
    %c8_i32_58 = arith.constant 8 : i32
    %213 = arith.muli %c6_i32, %c8_i32_58 : i32
    %214 = tpu.assume_multiple %213, 8 : i32
    %215 = arith.index_cast %214 : i32 to index
    %c0_59 = arith.constant 0 : index
    %216 = vector.load %arg8[%215, %c0_59] : memref<64x128xf32, #tpu.memory_space<vmem>>, vector<8x128xf32>
    %217 = arith.truncf %206 : vector<8x32xf32> to vector<8x32xbf16>
    %cst_60 = arith.constant dense<0.000000e+00> : vector<8x128xf32>
    %218 = tpu.matmul %217, %6, %cst_60 {dimension_numbers = #tpu.dot_dimension_numbers<[1], [0], [0], [1], [0, 0, 1, 1], [], []>} : vector<8x32xbf16>, vector<32x128xbf16>, vector<8x128xf32> -> vector<8x128xf32>
    %219 = arith.addf %216, %218 : vector<8x128xf32>
    %220 = vector.extract_strided_slice %219 {offsets = [0, 0], sizes = [8, 96], strides = [1, 1]} : vector<8x128xf32> to vector<8x96xf32>
    %221 = arith.negf %220 : vector<8x96xf32>
    %222 = math.exp %221 : vector<8x96xf32>
    %cst_61 = arith.constant 1.000000e+00 : f32
    %223 = vector.broadcast %cst_61 : f32 to vector<8x96xf32>
    %224 = arith.addf %223, %222 : vector<8x96xf32>
    %225 = arith.divf %223, %224 : vector<8x96xf32>
    %226 = vector.extract_strided_slice %225 {offsets = [0, 0], sizes = [8, 32], strides = [1, 1]} : vector<8x96xf32> to vector<8x32xf32>
    %227 = vector.extract_strided_slice %225 {offsets = [0, 32], sizes = [8, 32], strides = [1, 1]} : vector<8x96xf32> to vector<8x32xf32>
    %228 = vector.extract_strided_slice %225 {offsets = [0, 64], sizes = [8, 32], strides = [1, 1]} : vector<8x96xf32> to vector<8x32xf32>
    %229 = vector.extract_strided_slice %219 {offsets = [0, 96], sizes = [8, 32], strides = [1, 1]} : vector<8x128xf32> to vector<8x32xf32>
    %230 = math.tanh %229 : vector<8x32xf32>
    %231 = arith.mulf %227, %207 : vector<8x32xf32>
    %232 = arith.mulf %226, %230 : vector<8x32xf32>
    %233 = arith.addf %231, %232 : vector<8x32xf32>
    %234 = math.tanh %233 : vector<8x32xf32>
    %235 = arith.mulf %228, %234 : vector<8x32xf32>
    %236 = arith.index_cast %214 : i32 to index
    %c0_62 = arith.constant 0 : index
    %237 = vector.load %arg2[%236, %c0_62] : memref<64x32xf32, #tpu.memory_space<vmem>>, vector<8x32xf32>
    %cst_63 = arith.constant 0.000000e+00 : f32
    %238 = vector.broadcast %cst_63 : f32 to vector<8x32xf32>
    %239 = arith.cmpf ogt, %237, %238 : vector<8x32xf32>
    %240 = arith.select %239, %235, %206 : vector<8x32xi1>, vector<8x32xf32>
    %241 = arith.select %239, %233, %207 : vector<8x32xi1>, vector<8x32xf32>
    %cst_64 = arith.constant 0.000000e+00 : f32
    %242 = vector.broadcast %cst_64 : f32 to vector<8x32xf32>
    %243 = arith.select %239, %235, %242 : vector<8x32xi1>, vector<8x32xf32>
    %244 = arith.truncf %243 : vector<8x32xf32> to vector<8x32xbf16>
    %245 = arith.index_cast %214 : i32 to index
    %c0_65 = arith.constant 0 : index
    %246 = vector.load %arg9[%245, %c0_65] : memref<64x32xbf16, #tpu.memory_space<vmem>>, vector<8x32xbf16>
    tpu.vector_store %arg9[%245, %c0_65], %244 {strides = array<i32>} : memref<64x32xbf16, #tpu.memory_space<vmem>>, vector<8x32xbf16>,
    %c7_i32 = arith.constant 7 : i32
    %c8_i32_66 = arith.constant 8 : i32
    %247 = arith.muli %c7_i32, %c8_i32_66 : i32
    %248 = tpu.assume_multiple %247, 8 : i32
    %249 = arith.index_cast %248 : i32 to index
    %c0_67 = arith.constant 0 : index
    %250 = vector.load %arg8[%249, %c0_67] : memref<64x128xf32, #tpu.memory_space<vmem>>, vector<8x128xf32>
    %251 = arith.truncf %240 : vector<8x32xf32> to vector<8x32xbf16>
    %cst_68 = arith.constant dense<0.000000e+00> : vector<8x128xf32>
    %252 = tpu.matmul %251, %6, %cst_68 {dimension_numbers = #tpu.dot_dimension_numbers<[1], [0], [0], [1], [0, 0, 1, 1], [], []>} : vector<8x32xbf16>, vector<32x128xbf16>, vector<8x128xf32> -> vector<8x128xf32>
    %253 = arith.addf %250, %252 : vector<8x128xf32>
    %254 = vector.extract_strided_slice %253 {offsets = [0, 0], sizes = [8, 96], strides = [1, 1]} : vector<8x128xf32> to vector<8x96xf32>
    %255 = arith.negf %254 : vector<8x96xf32>
    %256 = math.exp %255 : vector<8x96xf32>
    %cst_69 = arith.constant 1.000000e+00 : f32
    %257 = vector.broadcast %cst_69 : f32 to vector<8x96xf32>
    %258 = arith.addf %257, %256 : vector<8x96xf32>
    %259 = arith.divf %257, %258 : vector<8x96xf32>
    %260 = vector.extract_strided_slice %259 {offsets = [0, 0], sizes = [8, 32], strides = [1, 1]} : vector<8x96xf32> to vector<8x32xf32>
    %261 = vector.extract_strided_slice %259 {offsets = [0, 32], sizes = [8, 32], strides = [1, 1]} : vector<8x96xf32> to vector<8x32xf32>
    %262 = vector.extract_strided_slice %259 {offsets = [0, 64], sizes = [8, 32], strides = [1, 1]} : vector<8x96xf32> to vector<8x32xf32>
    %263 = vector.extract_strided_slice %253 {offsets = [0, 96], sizes = [8, 32], strides = [1, 1]} : vector<8x128xf32> to vector<8x32xf32>
    %264 = math.tanh %263 : vector<8x32xf32>
    %265 = arith.mulf %261, %241 : vector<8x32xf32>
    %266 = arith.mulf %260, %264 : vector<8x32xf32>
    %267 = arith.addf %265, %266 : vector<8x32xf32>
    %268 = math.tanh %267 : vector<8x32xf32>
    %269 = arith.mulf %262, %268 : vector<8x32xf32>
    %270 = arith.index_cast %248 : i32 to index
    %c0_70 = arith.constant 0 : index
    %271 = vector.load %arg2[%270, %c0_70] : memref<64x32xf32, #tpu.memory_space<vmem>>, vector<8x32xf32>
    %cst_71 = arith.constant 0.000000e+00 : f32
    %272 = vector.broadcast %cst_71 : f32 to vector<8x32xf32>
    %273 = arith.cmpf ogt, %271, %272 : vector<8x32xf32>
    %274 = arith.select %273, %269, %240 : vector<8x32xi1>, vector<8x32xf32>
    %275 = arith.select %273, %267, %241 : vector<8x32xi1>, vector<8x32xf32>
    %cst_72 = arith.constant 0.000000e+00 : f32
    %276 = vector.broadcast %cst_72 : f32 to vector<8x32xf32>
    %277 = arith.select %273, %269, %276 : vector<8x32xi1>, vector<8x32xf32>
    %278 = arith.truncf %277 : vector<8x32xf32> to vector<8x32xbf16>
    %279 = arith.index_cast %248 : i32 to index
    %c0_73 = arith.constant 0 : index
    %280 = vector.load %arg9[%279, %c0_73] : memref<64x32xbf16, #tpu.memory_space<vmem>>, vector<8x32xbf16>
    tpu.vector_store %arg9[%279, %c0_73], %278 {strides = array<i32>} : memref<64x32xbf16, #tpu.memory_space<vmem>>, vector<8x32xbf16>,
    %c8_i32_74 = arith.constant 8 : i32
    %c0_75 = arith.constant 0 : index
    %c0_76 = arith.constant 0 : index
    %c0_77 = arith.constant 0 : index
    %281 = vector.load %arg6[%c0_75, %c0_76, %c0_77] : memref<2x8x32xf32, #tpu.memory_space<vmem>>, vector<1x8x32xf32>
    %282 = vector.shape_cast %281 : vector<1x8x32xf32> to vector<8x32xf32>
    %283 = vector.shape_cast %274 : vector<8x32xf32> to vector<1x8x32xf32>
    tpu.vector_store %arg6[%c0_75, %c0_76, %c0_77], %283 {strides = array<i32>} : memref<2x8x32xf32, #tpu.memory_space<vmem>>, vector<1x8x32xf32>,
    %c0_78 = arith.constant 0 : index
    %c0_79 = arith.constant 0 : index
    %c0_80 = arith.constant 0 : index
    %284 = vector.load %arg7[%c0_78, %c0_79, %c0_80] : memref<2x8x32xf32, #tpu.memory_space<vmem>>, vector<1x8x32xf32>
    %285 = vector.shape_cast %284 : vector<1x8x32xf32> to vector<8x32xf32>
    %286 = vector.shape_cast %275 : vector<8x32xf32> to vector<1x8x32xf32>
    tpu.vector_store %arg7[%c0_78, %c0_79, %c0_80], %286 {strides = array<i32>} : memref<2x8x32xf32, #tpu.memory_space<vmem>>, vector<1x8x32xf32>,
    %c0_81 = arith.constant 0 : index
    %c0_82 = arith.constant 0 : index
    %287 = vector.load %arg9[%c0_81, %c0_82] : memref<64x32xbf16, #tpu.memory_space<vmem>>, vector<64x32xbf16>
    %c1 = arith.constant 1 : index
    %c0_83 = arith.constant 0 : index
    %c0_84 = arith.constant 0 : index
    %288 = vector.load %arg3[%c1, %c0_83, %c0_84] : memref<2x32x128xbf16, #tpu.memory_space<vmem>>, vector<1x32x128xbf16>
    %289 = vector.shape_cast %288 : vector<1x32x128xbf16> to vector<32x128xbf16>
    %cst_85 = arith.constant dense<0.000000e+00> : vector<64x128xf32>
    %290 = tpu.matmul %287, %289, %cst_85 {dimension_numbers = #tpu.dot_dimension_numbers<[1], [0], [0], [1], [0, 0, 1, 1], [], []>} : vector<64x32xbf16>, vector<32x128xbf16>, vector<64x128xf32> -> vector<64x128xf32>
    %c0_86 = arith.constant 0 : index
    %c0_87 = arith.constant 0 : index
    %291 = vector.load %arg8[%c0_86, %c0_87] : memref<64x128xf32, #tpu.memory_space<vmem>>, vector<64x128xf32>
    tpu.vector_store %arg8[%c0_86, %c0_87], %290 {strides = array<i32>} : memref<64x128xf32, #tpu.memory_space<vmem>>, vector<64x128xf32>,
    %c1_88 = arith.constant 1 : index
    %c0_89 = arith.constant 0 : index
    %c0_90 = arith.constant 0 : index
    %292 = vector.load %arg4[%c1_88, %c0_89, %c0_90] : memref<2x32x128xbf16, #tpu.memory_space<vmem>>, vector<1x32x128xbf16>
    %293 = vector.shape_cast %292 : vector<1x32x128xbf16> to vector<32x128xbf16>
    %cst_91 = arith.constant 0.000000e+00 : f32
    %294 = vector.broadcast %cst_91 : f32 to vector<8x32xf32>
    %cst_92 = arith.constant 0.000000e+00 : f32
    %295 = vector.broadcast %cst_92 : f32 to vector<8x32xf32>
    %c0_i32_93 = arith.constant 0 : i32
    %c8_i32_94 = arith.constant 8 : i32
    %296 = arith.muli %c0_i32_93, %c8_i32_94 : i32
    %297 = tpu.assume_multiple %296, 8 : i32
    %298 = arith.index_cast %297 : i32 to index
    %c0_95 = arith.constant 0 : index
    %299 = vector.load %arg8[%298, %c0_95] : memref<64x128xf32, #tpu.memory_space<vmem>>, vector<8x128xf32>
    %300 = arith.truncf %294 : vector<8x32xf32> to vector<8x32xbf16>
    %cst_96 = arith.constant dense<0.000000e+00> : vector<8x128xf32>
    %301 = tpu.matmul %300, %293, %cst_96 {dimension_numbers = #tpu.dot_dimension_numbers<[1], [0], [0], [1], [0, 0, 1, 1], [], []>} : vector<8x32xbf16>, vector<32x128xbf16>, vector<8x128xf32> -> vector<8x128xf32>
    %302 = arith.addf %299, %301 : vector<8x128xf32>
    %303 = vector.extract_strided_slice %302 {offsets = [0, 0], sizes = [8, 96], strides = [1, 1]} : vector<8x128xf32> to vector<8x96xf32>
    %304 = arith.negf %303 : vector<8x96xf32>
    %305 = math.exp %304 : vector<8x96xf32>
    %cst_97 = arith.constant 1.000000e+00 : f32
    %306 = vector.broadcast %cst_97 : f32 to vector<8x96xf32>
    %307 = arith.addf %306, %305 : vector<8x96xf32>
    %308 = arith.divf %306, %307 : vector<8x96xf32>
    %309 = vector.extract_strided_slice %308 {offsets = [0, 0], sizes = [8, 32], strides = [1, 1]} : vector<8x96xf32> to vector<8x32xf32>
    %310 = vector.extract_strided_slice %308 {offsets = [0, 32], sizes = [8, 32], strides = [1, 1]} : vector<8x96xf32> to vector<8x32xf32>
    %311 = vector.extract_strided_slice %308 {offsets = [0, 64], sizes = [8, 32], strides = [1, 1]} : vector<8x96xf32> to vector<8x32xf32>
    %312 = vector.extract_strided_slice %302 {offsets = [0, 96], sizes = [8, 32], strides = [1, 1]} : vector<8x128xf32> to vector<8x32xf32>
    %313 = math.tanh %312 : vector<8x32xf32>
    %314 = arith.mulf %310, %295 : vector<8x32xf32>
    %315 = arith.mulf %309, %313 : vector<8x32xf32>
    %316 = arith.addf %314, %315 : vector<8x32xf32>
    %317 = math.tanh %316 : vector<8x32xf32>
    %318 = arith.mulf %311, %317 : vector<8x32xf32>
    %319 = arith.index_cast %297 : i32 to index
    %c0_98 = arith.constant 0 : index
    %320 = vector.load %arg2[%319, %c0_98] : memref<64x32xf32, #tpu.memory_space<vmem>>, vector<8x32xf32>
    %cst_99 = arith.constant 0.000000e+00 : f32
    %321 = vector.broadcast %cst_99 : f32 to vector<8x32xf32>
    %322 = arith.cmpf ogt, %320, %321 : vector<8x32xf32>
    %323 = arith.select %322, %318, %294 : vector<8x32xi1>, vector<8x32xf32>
    %324 = arith.select %322, %316, %295 : vector<8x32xi1>, vector<8x32xf32>
    %cst_100 = arith.constant 0.000000e+00 : f32
    %325 = vector.broadcast %cst_100 : f32 to vector<8x32xf32>
    %326 = arith.select %322, %318, %325 : vector<8x32xi1>, vector<8x32xf32>
    %327 = arith.index_cast %297 : i32 to index
    %c0_101 = arith.constant 0 : index
    %328 = vector.load %arg5[%327, %c0_101] : memref<64x32xf32, #tpu.memory_space<vmem>>, vector<8x32xf32>
    tpu.vector_store %arg5[%327, %c0_101], %326 {strides = array<i32>} : memref<64x32xf32, #tpu.memory_space<vmem>>, vector<8x32xf32>,
    %c1_i32_102 = arith.constant 1 : i32
    %c8_i32_103 = arith.constant 8 : i32
    %329 = arith.muli %c1_i32_102, %c8_i32_103 : i32
    %330 = tpu.assume_multiple %329, 8 : i32
    %331 = arith.index_cast %330 : i32 to index
    %c0_104 = arith.constant 0 : index
    %332 = vector.load %arg8[%331, %c0_104] : memref<64x128xf32, #tpu.memory_space<vmem>>, vector<8x128xf32>
    %333 = arith.truncf %323 : vector<8x32xf32> to vector<8x32xbf16>
    %cst_105 = arith.constant dense<0.000000e+00> : vector<8x128xf32>
    %334 = tpu.matmul %333, %293, %cst_105 {dimension_numbers = #tpu.dot_dimension_numbers<[1], [0], [0], [1], [0, 0, 1, 1], [], []>} : vector<8x32xbf16>, vector<32x128xbf16>, vector<8x128xf32> -> vector<8x128xf32>
    %335 = arith.addf %332, %334 : vector<8x128xf32>
    %336 = vector.extract_strided_slice %335 {offsets = [0, 0], sizes = [8, 96], strides = [1, 1]} : vector<8x128xf32> to vector<8x96xf32>
    %337 = arith.negf %336 : vector<8x96xf32>
    %338 = math.exp %337 : vector<8x96xf32>
    %cst_106 = arith.constant 1.000000e+00 : f32
    %339 = vector.broadcast %cst_106 : f32 to vector<8x96xf32>
    %340 = arith.addf %339, %338 : vector<8x96xf32>
    %341 = arith.divf %339, %340 : vector<8x96xf32>
    %342 = vector.extract_strided_slice %341 {offsets = [0, 0], sizes = [8, 32], strides = [1, 1]} : vector<8x96xf32> to vector<8x32xf32>
    %343 = vector.extract_strided_slice %341 {offsets = [0, 32], sizes = [8, 32], strides = [1, 1]} : vector<8x96xf32> to vector<8x32xf32>
    %344 = vector.extract_strided_slice %341 {offsets = [0, 64], sizes = [8, 32], strides = [1, 1]} : vector<8x96xf32> to vector<8x32xf32>
    %345 = vector.extract_strided_slice %335 {offsets = [0, 96], sizes = [8, 32], strides = [1, 1]} : vector<8x128xf32> to vector<8x32xf32>
    %346 = math.tanh %345 : vector<8x32xf32>
    %347 = arith.mulf %343, %324 : vector<8x32xf32>
    %348 = arith.mulf %342, %346 : vector<8x32xf32>
    %349 = arith.addf %347, %348 : vector<8x32xf32>
    %350 = math.tanh %349 : vector<8x32xf32>
    %351 = arith.mulf %344, %350 : vector<8x32xf32>
    %352 = arith.index_cast %330 : i32 to index
    %c0_107 = arith.constant 0 : index
    %353 = vector.load %arg2[%352, %c0_107] : memref<64x32xf32, #tpu.memory_space<vmem>>, vector<8x32xf32>
    %cst_108 = arith.constant 0.000000e+00 : f32
    %354 = vector.broadcast %cst_108 : f32 to vector<8x32xf32>
    %355 = arith.cmpf ogt, %353, %354 : vector<8x32xf32>
    %356 = arith.select %355, %351, %323 : vector<8x32xi1>, vector<8x32xf32>
    %357 = arith.select %355, %349, %324 : vector<8x32xi1>, vector<8x32xf32>
    %cst_109 = arith.constant 0.000000e+00 : f32
    %358 = vector.broadcast %cst_109 : f32 to vector<8x32xf32>
    %359 = arith.select %355, %351, %358 : vector<8x32xi1>, vector<8x32xf32>
    %360 = arith.index_cast %330 : i32 to index
    %c0_110 = arith.constant 0 : index
    %361 = vector.load %arg5[%360, %c0_110] : memref<64x32xf32, #tpu.memory_space<vmem>>, vector<8x32xf32>
    tpu.vector_store %arg5[%360, %c0_110], %359 {strides = array<i32>} : memref<64x32xf32, #tpu.memory_space<vmem>>, vector<8x32xf32>,
    %c2_i32_111 = arith.constant 2 : i32
    %c8_i32_112 = arith.constant 8 : i32
    %362 = arith.muli %c2_i32_111, %c8_i32_112 : i32
    %363 = tpu.assume_multiple %362, 8 : i32
    %364 = arith.index_cast %363 : i32 to index
    %c0_113 = arith.constant 0 : index
    %365 = vector.load %arg8[%364, %c0_113] : memref<64x128xf32, #tpu.memory_space<vmem>>, vector<8x128xf32>
    %366 = arith.truncf %356 : vector<8x32xf32> to vector<8x32xbf16>
    %cst_114 = arith.constant dense<0.000000e+00> : vector<8x128xf32>
    %367 = tpu.matmul %366, %293, %cst_114 {dimension_numbers = #tpu.dot_dimension_numbers<[1], [0], [0], [1], [0, 0, 1, 1], [], []>} : vector<8x32xbf16>, vector<32x128xbf16>, vector<8x128xf32> -> vector<8x128xf32>
    %368 = arith.addf %365, %367 : vector<8x128xf32>
    %369 = vector.extract_strided_slice %368 {offsets = [0, 0], sizes = [8, 96], strides = [1, 1]} : vector<8x128xf32> to vector<8x96xf32>
    %370 = arith.negf %369 : vector<8x96xf32>
    %371 = math.exp %370 : vector<8x96xf32>
    %cst_115 = arith.constant 1.000000e+00 : f32
    %372 = vector.broadcast %cst_115 : f32 to vector<8x96xf32>
    %373 = arith.addf %372, %371 : vector<8x96xf32>
    %374 = arith.divf %372, %373 : vector<8x96xf32>
    %375 = vector.extract_strided_slice %374 {offsets = [0, 0], sizes = [8, 32], strides = [1, 1]} : vector<8x96xf32> to vector<8x32xf32>
    %376 = vector.extract_strided_slice %374 {offsets = [0, 32], sizes = [8, 32], strides = [1, 1]} : vector<8x96xf32> to vector<8x32xf32>
    %377 = vector.extract_strided_slice %374 {offsets = [0, 64], sizes = [8, 32], strides = [1, 1]} : vector<8x96xf32> to vector<8x32xf32>
    %378 = vector.extract_strided_slice %368 {offsets = [0, 96], sizes = [8, 32], strides = [1, 1]} : vector<8x128xf32> to vector<8x32xf32>
    %379 = math.tanh %378 : vector<8x32xf32>
    %380 = arith.mulf %376, %357 : vector<8x32xf32>
    %381 = arith.mulf %375, %379 : vector<8x32xf32>
    %382 = arith.addf %380, %381 : vector<8x32xf32>
    %383 = math.tanh %382 : vector<8x32xf32>
    %384 = arith.mulf %377, %383 : vector<8x32xf32>
    %385 = arith.index_cast %363 : i32 to index
    %c0_116 = arith.constant 0 : index
    %386 = vector.load %arg2[%385, %c0_116] : memref<64x32xf32, #tpu.memory_space<vmem>>, vector<8x32xf32>
    %cst_117 = arith.constant 0.000000e+00 : f32
    %387 = vector.broadcast %cst_117 : f32 to vector<8x32xf32>
    %388 = arith.cmpf ogt, %386, %387 : vector<8x32xf32>
    %389 = arith.select %388, %384, %356 : vector<8x32xi1>, vector<8x32xf32>
    %390 = arith.select %388, %382, %357 : vector<8x32xi1>, vector<8x32xf32>
    %cst_118 = arith.constant 0.000000e+00 : f32
    %391 = vector.broadcast %cst_118 : f32 to vector<8x32xf32>
    %392 = arith.select %388, %384, %391 : vector<8x32xi1>, vector<8x32xf32>
    %393 = arith.index_cast %363 : i32 to index
    %c0_119 = arith.constant 0 : index
    %394 = vector.load %arg5[%393, %c0_119] : memref<64x32xf32, #tpu.memory_space<vmem>>, vector<8x32xf32>
    tpu.vector_store %arg5[%393, %c0_119], %392 {strides = array<i32>} : memref<64x32xf32, #tpu.memory_space<vmem>>, vector<8x32xf32>,
    %c3_i32_120 = arith.constant 3 : i32
    %c8_i32_121 = arith.constant 8 : i32
    %395 = arith.muli %c3_i32_120, %c8_i32_121 : i32
    %396 = tpu.assume_multiple %395, 8 : i32
    %397 = arith.index_cast %396 : i32 to index
    %c0_122 = arith.constant 0 : index
    %398 = vector.load %arg8[%397, %c0_122] : memref<64x128xf32, #tpu.memory_space<vmem>>, vector<8x128xf32>
    %399 = arith.truncf %389 : vector<8x32xf32> to vector<8x32xbf16>
    %cst_123 = arith.constant dense<0.000000e+00> : vector<8x128xf32>
    %400 = tpu.matmul %399, %293, %cst_123 {dimension_numbers = #tpu.dot_dimension_numbers<[1], [0], [0], [1], [0, 0, 1, 1], [], []>} : vector<8x32xbf16>, vector<32x128xbf16>, vector<8x128xf32> -> vector<8x128xf32>
    %401 = arith.addf %398, %400 : vector<8x128xf32>
    %402 = vector.extract_strided_slice %401 {offsets = [0, 0], sizes = [8, 96], strides = [1, 1]} : vector<8x128xf32> to vector<8x96xf32>
    %403 = arith.negf %402 : vector<8x96xf32>
    %404 = math.exp %403 : vector<8x96xf32>
    %cst_124 = arith.constant 1.000000e+00 : f32
    %405 = vector.broadcast %cst_124 : f32 to vector<8x96xf32>
    %406 = arith.addf %405, %404 : vector<8x96xf32>
    %407 = arith.divf %405, %406 : vector<8x96xf32>
    %408 = vector.extract_strided_slice %407 {offsets = [0, 0], sizes = [8, 32], strides = [1, 1]} : vector<8x96xf32> to vector<8x32xf32>
    %409 = vector.extract_strided_slice %407 {offsets = [0, 32], sizes = [8, 32], strides = [1, 1]} : vector<8x96xf32> to vector<8x32xf32>
    %410 = vector.extract_strided_slice %407 {offsets = [0, 64], sizes = [8, 32], strides = [1, 1]} : vector<8x96xf32> to vector<8x32xf32>
    %411 = vector.extract_strided_slice %401 {offsets = [0, 96], sizes = [8, 32], strides = [1, 1]} : vector<8x128xf32> to vector<8x32xf32>
    %412 = math.tanh %411 : vector<8x32xf32>
    %413 = arith.mulf %409, %390 : vector<8x32xf32>
    %414 = arith.mulf %408, %412 : vector<8x32xf32>
    %415 = arith.addf %413, %414 : vector<8x32xf32>
    %416 = math.tanh %415 : vector<8x32xf32>
    %417 = arith.mulf %410, %416 : vector<8x32xf32>
    %418 = arith.index_cast %396 : i32 to index
    %c0_125 = arith.constant 0 : index
    %419 = vector.load %arg2[%418, %c0_125] : memref<64x32xf32, #tpu.memory_space<vmem>>, vector<8x32xf32>
    %cst_126 = arith.constant 0.000000e+00 : f32
    %420 = vector.broadcast %cst_126 : f32 to vector<8x32xf32>
    %421 = arith.cmpf ogt, %419, %420 : vector<8x32xf32>
    %422 = arith.select %421, %417, %389 : vector<8x32xi1>, vector<8x32xf32>
    %423 = arith.select %421, %415, %390 : vector<8x32xi1>, vector<8x32xf32>
    %cst_127 = arith.constant 0.000000e+00 : f32
    %424 = vector.broadcast %cst_127 : f32 to vector<8x32xf32>
    %425 = arith.select %421, %417, %424 : vector<8x32xi1>, vector<8x32xf32>
    %426 = arith.index_cast %396 : i32 to index
    %c0_128 = arith.constant 0 : index
    %427 = vector.load %arg5[%426, %c0_128] : memref<64x32xf32, #tpu.memory_space<vmem>>, vector<8x32xf32>
    tpu.vector_store %arg5[%426, %c0_128], %425 {strides = array<i32>} : memref<64x32xf32, #tpu.memory_space<vmem>>, vector<8x32xf32>,
    %c4_i32_129 = arith.constant 4 : i32
    %c8_i32_130 = arith.constant 8 : i32
    %428 = arith.muli %c4_i32_129, %c8_i32_130 : i32
    %429 = tpu.assume_multiple %428, 8 : i32
    %430 = arith.index_cast %429 : i32 to index
    %c0_131 = arith.constant 0 : index
    %431 = vector.load %arg8[%430, %c0_131] : memref<64x128xf32, #tpu.memory_space<vmem>>, vector<8x128xf32>
    %432 = arith.truncf %422 : vector<8x32xf32> to vector<8x32xbf16>
    %cst_132 = arith.constant dense<0.000000e+00> : vector<8x128xf32>
    %433 = tpu.matmul %432, %293, %cst_132 {dimension_numbers = #tpu.dot_dimension_numbers<[1], [0], [0], [1], [0, 0, 1, 1], [], []>} : vector<8x32xbf16>, vector<32x128xbf16>, vector<8x128xf32> -> vector<8x128xf32>
    %434 = arith.addf %431, %433 : vector<8x128xf32>
    %435 = vector.extract_strided_slice %434 {offsets = [0, 0], sizes = [8, 96], strides = [1, 1]} : vector<8x128xf32> to vector<8x96xf32>
    %436 = arith.negf %435 : vector<8x96xf32>
    %437 = math.exp %436 : vector<8x96xf32>
    %cst_133 = arith.constant 1.000000e+00 : f32
    %438 = vector.broadcast %cst_133 : f32 to vector<8x96xf32>
    %439 = arith.addf %438, %437 : vector<8x96xf32>
    %440 = arith.divf %438, %439 : vector<8x96xf32>
    %441 = vector.extract_strided_slice %440 {offsets = [0, 0], sizes = [8, 32], strides = [1, 1]} : vector<8x96xf32> to vector<8x32xf32>
    %442 = vector.extract_strided_slice %440 {offsets = [0, 32], sizes = [8, 32], strides = [1, 1]} : vector<8x96xf32> to vector<8x32xf32>
    %443 = vector.extract_strided_slice %440 {offsets = [0, 64], sizes = [8, 32], strides = [1, 1]} : vector<8x96xf32> to vector<8x32xf32>
    %444 = vector.extract_strided_slice %434 {offsets = [0, 96], sizes = [8, 32], strides = [1, 1]} : vector<8x128xf32> to vector<8x32xf32>
    %445 = math.tanh %444 : vector<8x32xf32>
    %446 = arith.mulf %442, %423 : vector<8x32xf32>
    %447 = arith.mulf %441, %445 : vector<8x32xf32>
    %448 = arith.addf %446, %447 : vector<8x32xf32>
    %449 = math.tanh %448 : vector<8x32xf32>
    %450 = arith.mulf %443, %449 : vector<8x32xf32>
    %451 = arith.index_cast %429 : i32 to index
    %c0_134 = arith.constant 0 : index
    %452 = vector.load %arg2[%451, %c0_134] : memref<64x32xf32, #tpu.memory_space<vmem>>, vector<8x32xf32>
    %cst_135 = arith.constant 0.000000e+00 : f32
    %453 = vector.broadcast %cst_135 : f32 to vector<8x32xf32>
    %454 = arith.cmpf ogt, %452, %453 : vector<8x32xf32>
    %455 = arith.select %454, %450, %422 : vector<8x32xi1>, vector<8x32xf32>
    %456 = arith.select %454, %448, %423 : vector<8x32xi1>, vector<8x32xf32>
    %cst_136 = arith.constant 0.000000e+00 : f32
    %457 = vector.broadcast %cst_136 : f32 to vector<8x32xf32>
    %458 = arith.select %454, %450, %457 : vector<8x32xi1>, vector<8x32xf32>
    %459 = arith.index_cast %429 : i32 to index
    %c0_137 = arith.constant 0 : index
    %460 = vector.load %arg5[%459, %c0_137] : memref<64x32xf32, #tpu.memory_space<vmem>>, vector<8x32xf32>
    tpu.vector_store %arg5[%459, %c0_137], %458 {strides = array<i32>} : memref<64x32xf32, #tpu.memory_space<vmem>>, vector<8x32xf32>,
    %c5_i32_138 = arith.constant 5 : i32
    %c8_i32_139 = arith.constant 8 : i32
    %461 = arith.muli %c5_i32_138, %c8_i32_139 : i32
    %462 = tpu.assume_multiple %461, 8 : i32
    %463 = arith.index_cast %462 : i32 to index
    %c0_140 = arith.constant 0 : index
    %464 = vector.load %arg8[%463, %c0_140] : memref<64x128xf32, #tpu.memory_space<vmem>>, vector<8x128xf32>
    %465 = arith.truncf %455 : vector<8x32xf32> to vector<8x32xbf16>
    %cst_141 = arith.constant dense<0.000000e+00> : vector<8x128xf32>
    %466 = tpu.matmul %465, %293, %cst_141 {dimension_numbers = #tpu.dot_dimension_numbers<[1], [0], [0], [1], [0, 0, 1, 1], [], []>} : vector<8x32xbf16>, vector<32x128xbf16>, vector<8x128xf32> -> vector<8x128xf32>
    %467 = arith.addf %464, %466 : vector<8x128xf32>
    %468 = vector.extract_strided_slice %467 {offsets = [0, 0], sizes = [8, 96], strides = [1, 1]} : vector<8x128xf32> to vector<8x96xf32>
    %469 = arith.negf %468 : vector<8x96xf32>
    %470 = math.exp %469 : vector<8x96xf32>
    %cst_142 = arith.constant 1.000000e+00 : f32
    %471 = vector.broadcast %cst_142 : f32 to vector<8x96xf32>
    %472 = arith.addf %471, %470 : vector<8x96xf32>
    %473 = arith.divf %471, %472 : vector<8x96xf32>
    %474 = vector.extract_strided_slice %473 {offsets = [0, 0], sizes = [8, 32], strides = [1, 1]} : vector<8x96xf32> to vector<8x32xf32>
    %475 = vector.extract_strided_slice %473 {offsets = [0, 32], sizes = [8, 32], strides = [1, 1]} : vector<8x96xf32> to vector<8x32xf32>
    %476 = vector.extract_strided_slice %473 {offsets = [0, 64], sizes = [8, 32], strides = [1, 1]} : vector<8x96xf32> to vector<8x32xf32>
    %477 = vector.extract_strided_slice %467 {offsets = [0, 96], sizes = [8, 32], strides = [1, 1]} : vector<8x128xf32> to vector<8x32xf32>
    %478 = math.tanh %477 : vector<8x32xf32>
    %479 = arith.mulf %475, %456 : vector<8x32xf32>
    %480 = arith.mulf %474, %478 : vector<8x32xf32>
    %481 = arith.addf %479, %480 : vector<8x32xf32>
    %482 = math.tanh %481 : vector<8x32xf32>
    %483 = arith.mulf %476, %482 : vector<8x32xf32>
    %484 = arith.index_cast %462 : i32 to index
    %c0_143 = arith.constant 0 : index
    %485 = vector.load %arg2[%484, %c0_143] : memref<64x32xf32, #tpu.memory_space<vmem>>, vector<8x32xf32>
    %cst_144 = arith.constant 0.000000e+00 : f32
    %486 = vector.broadcast %cst_144 : f32 to vector<8x32xf32>
    %487 = arith.cmpf ogt, %485, %486 : vector<8x32xf32>
    %488 = arith.select %487, %483, %455 : vector<8x32xi1>, vector<8x32xf32>
    %489 = arith.select %487, %481, %456 : vector<8x32xi1>, vector<8x32xf32>
    %cst_145 = arith.constant 0.000000e+00 : f32
    %490 = vector.broadcast %cst_145 : f32 to vector<8x32xf32>
    %491 = arith.select %487, %483, %490 : vector<8x32xi1>, vector<8x32xf32>
    %492 = arith.index_cast %462 : i32 to index
    %c0_146 = arith.constant 0 : index
    %493 = vector.load %arg5[%492, %c0_146] : memref<64x32xf32, #tpu.memory_space<vmem>>, vector<8x32xf32>
    tpu.vector_store %arg5[%492, %c0_146], %491 {strides = array<i32>} : memref<64x32xf32, #tpu.memory_space<vmem>>, vector<8x32xf32>,
    %c6_i32_147 = arith.constant 6 : i32
    %c8_i32_148 = arith.constant 8 : i32
    %494 = arith.muli %c6_i32_147, %c8_i32_148 : i32
    %495 = tpu.assume_multiple %494, 8 : i32
    %496 = arith.index_cast %495 : i32 to index
    %c0_149 = arith.constant 0 : index
    %497 = vector.load %arg8[%496, %c0_149] : memref<64x128xf32, #tpu.memory_space<vmem>>, vector<8x128xf32>
    %498 = arith.truncf %488 : vector<8x32xf32> to vector<8x32xbf16>
    %cst_150 = arith.constant dense<0.000000e+00> : vector<8x128xf32>
    %499 = tpu.matmul %498, %293, %cst_150 {dimension_numbers = #tpu.dot_dimension_numbers<[1], [0], [0], [1], [0, 0, 1, 1], [], []>} : vector<8x32xbf16>, vector<32x128xbf16>, vector<8x128xf32> -> vector<8x128xf32>
    %500 = arith.addf %497, %499 : vector<8x128xf32>
    %501 = vector.extract_strided_slice %500 {offsets = [0, 0], sizes = [8, 96], strides = [1, 1]} : vector<8x128xf32> to vector<8x96xf32>
    %502 = arith.negf %501 : vector<8x96xf32>
    %503 = math.exp %502 : vector<8x96xf32>
    %cst_151 = arith.constant 1.000000e+00 : f32
    %504 = vector.broadcast %cst_151 : f32 to vector<8x96xf32>
    %505 = arith.addf %504, %503 : vector<8x96xf32>
    %506 = arith.divf %504, %505 : vector<8x96xf32>
    %507 = vector.extract_strided_slice %506 {offsets = [0, 0], sizes = [8, 32], strides = [1, 1]} : vector<8x96xf32> to vector<8x32xf32>
    %508 = vector.extract_strided_slice %506 {offsets = [0, 32], sizes = [8, 32], strides = [1, 1]} : vector<8x96xf32> to vector<8x32xf32>
    %509 = vector.extract_strided_slice %506 {offsets = [0, 64], sizes = [8, 32], strides = [1, 1]} : vector<8x96xf32> to vector<8x32xf32>
    %510 = vector.extract_strided_slice %500 {offsets = [0, 96], sizes = [8, 32], strides = [1, 1]} : vector<8x128xf32> to vector<8x32xf32>
    %511 = math.tanh %510 : vector<8x32xf32>
    %512 = arith.mulf %508, %489 : vector<8x32xf32>
    %513 = arith.mulf %507, %511 : vector<8x32xf32>
    %514 = arith.addf %512, %513 : vector<8x32xf32>
    %515 = math.tanh %514 : vector<8x32xf32>
    %516 = arith.mulf %509, %515 : vector<8x32xf32>
    %517 = arith.index_cast %495 : i32 to index
    %c0_152 = arith.constant 0 : index
    %518 = vector.load %arg2[%517, %c0_152] : memref<64x32xf32, #tpu.memory_space<vmem>>, vector<8x32xf32>
    %cst_153 = arith.constant 0.000000e+00 : f32
    %519 = vector.broadcast %cst_153 : f32 to vector<8x32xf32>
    %520 = arith.cmpf ogt, %518, %519 : vector<8x32xf32>
    %521 = arith.select %520, %516, %488 : vector<8x32xi1>, vector<8x32xf32>
    %522 = arith.select %520, %514, %489 : vector<8x32xi1>, vector<8x32xf32>
    %cst_154 = arith.constant 0.000000e+00 : f32
    %523 = vector.broadcast %cst_154 : f32 to vector<8x32xf32>
    %524 = arith.select %520, %516, %523 : vector<8x32xi1>, vector<8x32xf32>
    %525 = arith.index_cast %495 : i32 to index
    %c0_155 = arith.constant 0 : index
    %526 = vector.load %arg5[%525, %c0_155] : memref<64x32xf32, #tpu.memory_space<vmem>>, vector<8x32xf32>
    tpu.vector_store %arg5[%525, %c0_155], %524 {strides = array<i32>} : memref<64x32xf32, #tpu.memory_space<vmem>>, vector<8x32xf32>,
    %c7_i32_156 = arith.constant 7 : i32
    %c8_i32_157 = arith.constant 8 : i32
    %527 = arith.muli %c7_i32_156, %c8_i32_157 : i32
    %528 = tpu.assume_multiple %527, 8 : i32
    %529 = arith.index_cast %528 : i32 to index
    %c0_158 = arith.constant 0 : index
    %530 = vector.load %arg8[%529, %c0_158] : memref<64x128xf32, #tpu.memory_space<vmem>>, vector<8x128xf32>
    %531 = arith.truncf %521 : vector<8x32xf32> to vector<8x32xbf16>
    %cst_159 = arith.constant dense<0.000000e+00> : vector<8x128xf32>
    %532 = tpu.matmul %531, %293, %cst_159 {dimension_numbers = #tpu.dot_dimension_numbers<[1], [0], [0], [1], [0, 0, 1, 1], [], []>} : vector<8x32xbf16>, vector<32x128xbf16>, vector<8x128xf32> -> vector<8x128xf32>
    %533 = arith.addf %530, %532 : vector<8x128xf32>
    %534 = vector.extract_strided_slice %533 {offsets = [0, 0], sizes = [8, 96], strides = [1, 1]} : vector<8x128xf32> to vector<8x96xf32>
    %535 = arith.negf %534 : vector<8x96xf32>
    %536 = math.exp %535 : vector<8x96xf32>
    %cst_160 = arith.constant 1.000000e+00 : f32
    %537 = vector.broadcast %cst_160 : f32 to vector<8x96xf32>
    %538 = arith.addf %537, %536 : vector<8x96xf32>
    %539 = arith.divf %537, %538 : vector<8x96xf32>
    %540 = vector.extract_strided_slice %539 {offsets = [0, 0], sizes = [8, 32], strides = [1, 1]} : vector<8x96xf32> to vector<8x32xf32>
    %541 = vector.extract_strided_slice %539 {offsets = [0, 32], sizes = [8, 32], strides = [1, 1]} : vector<8x96xf32> to vector<8x32xf32>
    %542 = vector.extract_strided_slice %539 {offsets = [0, 64], sizes = [8, 32], strides = [1, 1]} : vector<8x96xf32> to vector<8x32xf32>
    %543 = vector.extract_strided_slice %533 {offsets = [0, 96], sizes = [8, 32], strides = [1, 1]} : vector<8x128xf32> to vector<8x32xf32>
    %544 = math.tanh %543 : vector<8x32xf32>
    %545 = arith.mulf %541, %522 : vector<8x32xf32>
    %546 = arith.mulf %540, %544 : vector<8x32xf32>
    %547 = arith.addf %545, %546 : vector<8x32xf32>
    %548 = math.tanh %547 : vector<8x32xf32>
    %549 = arith.mulf %542, %548 : vector<8x32xf32>
    %550 = arith.index_cast %528 : i32 to index
    %c0_161 = arith.constant 0 : index
    %551 = vector.load %arg2[%550, %c0_161] : memref<64x32xf32, #tpu.memory_space<vmem>>, vector<8x32xf32>
    %cst_162 = arith.constant 0.000000e+00 : f32
    %552 = vector.broadcast %cst_162 : f32 to vector<8x32xf32>
    %553 = arith.cmpf ogt, %551, %552 : vector<8x32xf32>
    %554 = arith.select %553, %549, %521 : vector<8x32xi1>, vector<8x32xf32>
    %555 = arith.select %553, %547, %522 : vector<8x32xi1>, vector<8x32xf32>
    %cst_163 = arith.constant 0.000000e+00 : f32
    %556 = vector.broadcast %cst_163 : f32 to vector<8x32xf32>
    %557 = arith.select %553, %549, %556 : vector<8x32xi1>, vector<8x32xf32>
    %558 = arith.index_cast %528 : i32 to index
    %c0_164 = arith.constant 0 : index
    %559 = vector.load %arg5[%558, %c0_164] : memref<64x32xf32, #tpu.memory_space<vmem>>, vector<8x32xf32>
    tpu.vector_store %arg5[%558, %c0_164], %557 {strides = array<i32>} : memref<64x32xf32, #tpu.memory_space<vmem>>, vector<8x32xf32>,
    %c8_i32_165 = arith.constant 8 : i32
    %c1_166 = arith.constant 1 : index
    %c0_167 = arith.constant 0 : index
    %c0_168 = arith.constant 0 : index
    %560 = vector.load %arg6[%c1_166, %c0_167, %c0_168] : memref<2x8x32xf32, #tpu.memory_space<vmem>>, vector<1x8x32xf32>
    %561 = vector.shape_cast %560 : vector<1x8x32xf32> to vector<8x32xf32>
    %562 = vector.shape_cast %554 : vector<8x32xf32> to vector<1x8x32xf32>
    tpu.vector_store %arg6[%c1_166, %c0_167, %c0_168], %562 {strides = array<i32>} : memref<2x8x32xf32, #tpu.memory_space<vmem>>, vector<1x8x32xf32>,
    %c1_169 = arith.constant 1 : index
    %c0_170 = arith.constant 0 : index
    %c0_171 = arith.constant 0 : index
    %563 = vector.load %arg7[%c1_169, %c0_170, %c0_171] : memref<2x8x32xf32, #tpu.memory_space<vmem>>, vector<1x8x32xf32>
    %564 = vector.shape_cast %563 : vector<1x8x32xf32> to vector<8x32xf32>
    %565 = vector.shape_cast %555 : vector<8x32xf32> to vector<1x8x32xf32>
    tpu.vector_store %arg7[%c1_169, %c0_170, %c0_171], %565 {strides = array<i32>} : memref<2x8x32xf32, #tpu.memory_space<vmem>>, vector<1x8x32xf32>,
    return
  }
  func.func @transform_0(%arg0: i32) -> (i32, i32) {
    %c0_i32 = arith.constant 0 : i32
    %c0_i32_0 = arith.constant 0 : i32
    %c0_i32_1 = arith.constant 0 : i32
    return %c0_i32, %c0_i32_0 : i32, i32
  }
  func.func @transform_1(%arg0: i32) -> (i32, i32) {
    %c0_i32 = arith.constant 0 : i32
    %c0_i32_0 = arith.constant 0 : i32
    %c0_i32_1 = arith.constant 0 : i32
    return %c0_i32, %c0_i32_0 : i32, i32
  }
  func.func @transform_2(%arg0: i32) -> (i32, i32, i32) {
    %c0_i32 = arith.constant 0 : i32
    %c0_i32_0 = arith.constant 0 : i32
    %c0_i32_1 = arith.constant 0 : i32
    %c0_i32_2 = arith.constant 0 : i32
    return %c0_i32, %c0_i32_0, %c0_i32_1 : i32, i32, i32
  }
  func.func @transform_3(%arg0: i32) -> (i32, i32, i32) {
    %c0_i32 = arith.constant 0 : i32
    %c0_i32_0 = arith.constant 0 : i32
    %c0_i32_1 = arith.constant 0 : i32
    %c0_i32_2 = arith.constant 0 : i32
    return %c0_i32, %c0_i32_0, %c0_i32_1 : i32, i32, i32
  }
  func.func @transform_4(%arg0: i32) -> (i32, i32) {
    %c0_i32 = arith.constant 0 : i32
    %c0_i32_0 = arith.constant 0 : i32
    %c0_i32_1 = arith.constant 0 : i32
    return %c0_i32, %c0_i32_0 : i32, i32
  }
  func.func @transform_5(%arg0: i32) -> (i32, i32, i32) {
    %c0_i32 = arith.constant 0 : i32
    %c0_i32_0 = arith.constant 0 : i32
    %c0_i32_1 = arith.constant 0 : i32
    %c0_i32_2 = arith.constant 0 : i32
    return %c0_i32, %c0_i32_0, %c0_i32_1 : i32, i32, i32
  }
  func.func @transform_6(%arg0: i32) -> (i32, i32, i32) {
    %c0_i32 = arith.constant 0 : i32
    %c0_i32_0 = arith.constant 0 : i32
    %c0_i32_1 = arith.constant 0 : i32
    %c0_i32_2 = arith.constant 0 : i32
    return %c0_i32, %c0_i32_0, %c0_i32_1 : i32, i32, i32
  }
}

</mosaic_0001>

<llo_original>
// kernel: tpu_custom_call.1
$region0: #{tpu_custom_call.1}
  #allocation0 [shape = 'u32[]', space=smem, size = 0x4, offset = 0x4, fixed_abs, tag = 'smem constant byte address 0x4 - core index']
  #allocation1 [shape = 'u32[144,128]{1,0:T(1,128)}', space=vmem, size = 0x12000, scoped, tag = 'internal scratch']
  #allocation2 [shape = 'f32[64,128]{1,0:T(8,128)}', space=vmem, size = 0x8000, scoped, tag = 'scratch operand']
  #allocation3 [shape = 'bf16[64,32]{1,0:T(8,128)(2,1)}', space=vmem, size = 0x4000, scoped, tag = 'scratch operand']
  %s0 = inlined_call_operand.vmem [shape: bf16[64,32], index: 0, kind: input, shape index: {}]
  %s1 = inlined_call_operand.vmem [shape: f32[64,32], index: 1, kind: input, shape index: {}]
  %s2 = inlined_call_operand.vmem [shape: bf16[2,32,128], index: 2, kind: input, shape index: {}]
  %s3 = inlined_call_operand.vmem [shape: bf16[2,32,128], index: 3, kind: input, shape index: {}]
  %s4 = inlined_call_operand.vmem [shape: f32[64,32], index: 4, kind: output, shape index: {0}]
  %s5 = inlined_call_operand.hbm [shape: f32[2,8,32], index: 5, kind: output, shape index: {1}]
  %s6 = inlined_call_operand.hbm [shape: f32[2,8,32], index: 6, kind: output, shape index: {2}]
  %7 = xla_tuple %s4, %s5, %s6
  %s8 = sld [smem:[#allocation0]]
  $region42: #{tpu_custom_call.1} parent=0
    _
  %s10 = ssub.s32 1, %s8
  %s11 = scalar_select 0, %s10, %s8
  $region1: #{tpu_custom_call.1} parent=0
    #allocation4 [shape = 'u8[8192]{0}', space=vmem, size = 0x2000, scoped, tag = 'output window, operand 1, single buffered']
    #allocation5 [shape = 's32[1]{0}', space=sflag, size = 0x4, scoped, tag = 'scoped memory for tpu_custom_call.1']
    #allocation6 [shape = 'u8[8192]{0}', space=vmem, size = 0x2000, scoped, tag = 'output window, operand 2, single buffered']
    #allocation7 [shape = 's32[1]{0}', space=sflag, size = 0x4, scoped, tag = 'scoped memory for tpu_custom_call.1']
    %12 = vsyncpa [#allocation5], 0
    %13 = vsyncpa [#allocation7], 0
    // Predicated region
    $region2: #{tpu_custom_call.1} parent=1 // pred_check
      _
    $region3: #{tpu_custom_call.1} parent=1 // pred_check_branch
      %15 = sbr.rel (0) target = $region5
    $region4: #{tpu_custom_call.1} parent=1 // pred_region
      _
    $region5: #{tpu_custom_call.1} parent=1 // pred_fallthru
      _
    // Predicated region
    $region6: #{tpu_custom_call.1} parent=1 // pred_check
      _
    $region7: #{tpu_custom_call.1} parent=1 // pred_check_branch
      %17 = sbr.rel (0) target = $region9
    $region8: #{tpu_custom_call.1} parent=1 // pred_region
      _
    $region9: #{tpu_custom_call.1} parent=1 // pred_fallthru
      _
    // Predicated region
    $region10: #{tpu_custom_call.1} parent=1 // pred_check
      _
    $region11: #{tpu_custom_call.1} parent=1 // pred_check_branch
      %19 = sbr.rel (0) target = $region13
    $region12: #{tpu_custom_call.1} parent=1 // pred_region
      _
    $region13: #{tpu_custom_call.1} parent=1 // pred_fallthru
      _
    // Predicated region
    $region14: #{tpu_custom_call.1} parent=1 // pred_check
      _
    $region15: #{tpu_custom_call.1} parent=1 // pred_check_branch
      %21 = sbr.rel (0) target = $region17
    $region16: #{tpu_custom_call.1} parent=1 // pred_region
      _
    $region17: #{tpu_custom_call.1} parent=1 // pred_fallthru
      _
    %v23 = vld [vmem:[%s0] sm:$0xf]
    %v24 = vld [vmem:[%s0 + $0x4] sm:$0xf]
    %v25 = vld [vmem:[%s0 + $0x8] sm:$0xf]
    %v26 = vld [vmem:[%s0 + $0xc] sm:$0xf]
    %v27 = vld [vmem:[%s0 + $0x10] sm:$0xf]
    %v28 = vld [vmem:[%s0 + $0x14] sm:$0xf]
    %v29 = vld [vmem:[%s0 + $0x18] sm:$0xf]
    %v30 = vld [vmem:[%s0 + $0x1c] sm:$0xf]
    %v31 = vld [vmem:[%s2] sm:$0xf]
    %v32 = vld [vmem:[%s2 + $0x4] sm:$0xf]
    %v33 = vld [vmem:[%s2 + $0x8] sm:$0xf]
    %v34 = vld [vmem:[%s2 + $0xc] sm:$0xf]
    %v43 = vunpack.c.l.b16 %v23
    %v44 = vunpack.c.l.b16 %v24
    %v45 = vunpack.c.l.b16 %v25
    %v46 = vunpack.c.l.b16 %v26
    %v47 = vunpack.c.l.b16 %v27
    %v48 = vunpack.c.l.b16 %v28
    %v49 = vunpack.c.l.b16 %v29
    %v50 = vunpack.c.l.b16 %v30
    %v51 = vpack.c.b16 %v44, %v43
    %v52 = vpack.c.b16 %v46, %v45
    %v53 = vpack.c.b16 %v48, %v47
    %v54 = vpack.c.b16 %v50, %v49
    %v59 = vunpack.c.l.b16 %v31
    %v60 = vunpack.c.l.b16 %v32
    %v61 = vunpack.c.l.b16 %v33
    %v62 = vunpack.c.l.b16 %v34
    %v63 = vpack.c.b16 %v60, %v59
    %v64 = vpack.c.b16 %v62, %v61
    %vm67 = vcmask 261120
    %v69 = vsel %vm67, %v51, 0
    %v72 = vsel %vm67, %v52, 0
    %v75 = vsel %vm67, %v53, 0
    %v78 = vsel %vm67, %v54, 0
    %80 = vmatprep.subr.bf16.mxu0 0
    %81 = vmatpush1.bf16.msra.mxu0 0
    %82 = vmatprep.subr.bf16.mxu0 0
    %83 = vmatpush1.bf16.msra.mxu0 0
    %84 = vmatprep.subr.bf16.mxu0 0
    %85 = vmatpush1.bf16.msra.mxu0 0
    %86 = vmatprep.subr.bf16.mxu0 0
    %87 = vmatpush1.bf16.msra.mxu0 0
    %88 = vmatprep.subr.bf16.mxu0 0
    %89 = vmatpush1.bf16.msra.mxu0 0
    %90 = vmatprep.subr.bf16.mxu0 0
    %91 = vmatpush1.bf16.msra.mxu0 0
    %92 = vmatprep.subr.bf16.mxu0 0
    %93 = vmatpush1.bf16.msra.mxu0 %v64
    %94 = vmatprep.subr.bf16.mxu0 0
    %95 = vmatpush1.bf16.msra.mxu0 %v63
    %96 = vmatprep.subr.bf16.mxu0 0
    %97 = vmatpush2.bf16.msra.mxu0 0
    %98 = vmatprep.subr.bf16.mxu0 0
    %99 = vmatpush2.bf16.msra.mxu0 0
    %100 = vmatprep.subr.bf16.mxu0 0
    %101 = vmatpush2.bf16.msra.mxu0 0
    %102 = vmatprep.subr.bf16.mxu0 0
    %103 = vmatpush2.bf16.msra.mxu0 0
    %104 = vmatprep.subr.bf16.mxu0 0
    %105 = vmatpush2.bf16.msra.mxu0 0
    %106 = vmatprep.subr.bf16.mxu0 0
    %107 = vmatpush2.bf16.msra.mxu0 0
    %108 = vmatprep.subr.bf16.mxu0 0
    %109 = vmatpush2.bf16.msra.mxu0 0
    %110 = vmatprep.subr.bf16.mxu0 0
    %111 = vmatpush2.bf16.msra.mxu0 0
    %112 = vmatprep.mubr.bf16.mxu0 0
    %113 = vmatmul.mubr.bf16.gmra.mxu0 %v69
    %v114 = vpop.f32.mrf.mxu0
    %v115 = vadd.f32 0.0, %v114
    %v116 = vpop.f32.mrf.mxu0
    %v117 = vpop.f32.mrf.mxu0
    %v118 = vadd.f32 0.0, %v117
    %v119 = vpop.f32.mrf.mxu0
    %120 = vmatprep.mubr.bf16.mxu0 0
    %121 = vmatmul.mubr.bf16.gmra.mxu0 %v72
    %v122 = vpop.f32.mrf.mxu0
    %v123 = vadd.f32 0.0, %v122
    %v124 = vpop.f32.mrf.mxu0
    %v125 = vpop.f32.mrf.mxu0
    %v126 = vadd.f32 0.0, %v125
    %v127 = vpop.f32.mrf.mxu0
    %128 = vmatprep.mubr.bf16.mxu0 0
    %129 = vmatmul.mubr.bf16.gmra.mxu0 %v75
    %v130 = vpop.f32.mrf.mxu0
    %v131 = vadd.f32 0.0, %v130
    %v132 = vpop.f32.mrf.mxu0
    %v133 = vpop.f32.mrf.mxu0
    %v134 = vadd.f32 0.0, %v133
    %v135 = vpop.f32.mrf.mxu0
    %136 = vmatprep.mubr.bf16.mxu0 0
    %137 = vmatmul.mubr.bf16.gmra.mxu0 %v78
    %v138 = vpop.f32.mrf.mxu0
    %v139 = vadd.f32 0.0, %v138
    %v140 = vpop.f32.mrf.mxu0
    %v141 = vpop.f32.mrf.mxu0
    %v142 = vadd.f32 0.0, %v141
    %v143 = vpop.f32.mrf.mxu0
    %144 = vdwg.mxu0
    %145 = vst [vmem:[#allocation2] sm:$0xff] %v115
    %146 = vst [vmem:[#allocation2 + $0x8] sm:$0xff] %v118
    %147 = vst [vmem:[#allocation2 + $0x10] sm:$0xff] %v123
    %148 = vst [vmem:[#allocation2 + $0x18] sm:$0xff] %v126
    %149 = vst [vmem:[#allocation2 + $0x20] sm:$0xff] %v131
    %150 = vst [vmem:[#allocation2 + $0x28] sm:$0xff] %v134
    %151 = vst [vmem:[#allocation2 + $0x30] sm:$0xff] %v139
    %152 = vst [vmem:[#allocation2 + $0x38] sm:$0xff] %v142
    %v153 = vld [vmem:[%s3] sm:$0xf]
    %v154 = vld [vmem:[%s3 + $0x4] sm:$0xf]
    %v155 = vld [vmem:[%s3 + $0x8] sm:$0xf]
    %v156 = vld [vmem:[%s3 + $0xc] sm:$0xf]
    %v157 = vld [vmem:[#allocation2] sm:$0xff]
    %v162 = vunpack.c.l.b16 %v153
    %v163 = vunpack.c.l.b16 %v154
    %v164 = vunpack.c.l.b16 %v155
    %v165 = vunpack.c.l.b16 %v156
    %v166 = vpack.c.b16 %v163, %v162
    %v167 = vpack.c.b16 %v165, %v164
    %v171 = vsel %vm67, 0, 0
    %173 = vmatprep.subr.bf16.mxu0 0
    %174 = vmatpush1.bf16.msra.mxu0 0
    %175 = vmatprep.subr.bf16.mxu0 0
    %176 = vmatpush1.bf16.msra.mxu0 0
    %177 = vmatprep.subr.bf16.mxu0 0
    %178 = vmatpush1.bf16.msra.mxu0 0
    %179 = vmatprep.subr.bf16.mxu0 0
    %180 = vmatpush1.bf16.msra.mxu0 0
    %181 = vmatprep.subr.bf16.mxu0 0
    %182 = vmatpush1.bf16.msra.mxu0 0
    %183 = vmatprep.subr.bf16.mxu0 0
    %184 = vmatpush1.bf16.msra.mxu0 0
    %185 = vmatprep.subr.bf16.mxu0 0
    %186 = vmatpush1.bf16.msra.mxu0 %v167
    %187 = vmatprep.subr.bf16.mxu0 0
    %188 = vmatpush1.bf16.msra.mxu0 %v166
    %189 = vmatprep.subr.bf16.mxu0 0
    %190 = vmatpush2.bf16.msra.mxu0 0
    %191 = vmatprep.subr.bf16.mxu0 0
    %192 = vmatpush2.bf16.msra.mxu0 0
    %193 = vmatprep.subr.bf16.mxu0 0
    %194 = vmatpush2.bf16.msra.mxu0 0
    %195 = vmatprep.subr.bf16.mxu0 0
    %196 = vmatpush2.bf16.msra.mxu0 0
    %197 = vmatprep.subr.bf16.mxu0 0
    %198 = vmatpush2.bf16.msra.mxu0 0
    %199 = vmatprep.subr.bf16.mxu0 0
    %200 = vmatpush2.bf16.msra.mxu0 0
    %201 = vmatprep.subr.bf16.mxu0 0
    %202 = vmatpush2.bf16.msra.mxu0 0
    %203 = vmatprep.subr.bf16.mxu0 0
    %204 = vmatpush2.bf16.msra.mxu0 0
    %205 = vmatprep.mubr.bf16.mxu0 0
    %206 = vmatmul.mubr.bf16.gmra.mxu0 %v171
    %v207 = vpop.f32.mrf.mxu0
    %v208 = vadd.f32 0.0, %v207
    %v209 = vpop.f32.mrf.mxu0
    %v210 = vpop.f32.mrf.mxu0
    %v211 = vpop.f32.mrf.mxu0
    %212 = vdwg.mxu0
    %v213 = vadd.f32 %v157, %v208
    %v214 = vxor.u32 %v213, 2147483648
    %v215 = vmul.f32 %v214, 1.442695
    %v216 = vpow.pop %v215
    %v217 = vadd.f32 %v216, 1.0
    %v218 = vrcp.pop %v217
    %v219 = vmul.f32 1.0, %v218
    %v220 = vtanh.pop %v213
    %v221 = vmul.f32 %v219, 0.0
    %223 = vrot.lane.b32.xlu0 %v220, 32
    %v224 = vpop.permute.xlu0 %223
    %v226 = vmul.f32 %v219, %v224
    %228 = vrot.lane.b32.xlu0 %v226, 32
    %v229 = vpop.permute.xlu0 %228
    %v231 = vadd.f32 %v221, %v229
    %v232 = vtanh.pop %v231
    %234 = vrot.lane.b32.xlu0 %v232, 32
    %v235 = vpop.permute.xlu0 %234
    %v237 = vmul.f32 %v219, %v235
    %v238 = vld [vmem:[%s1] sm:$0xff]
    %vm239 = vcmp.gt.f32.partialorder %v238, 0.0
    %241 = vrot.lane.b32.xlu0 %v237, 64
    %v242 = vpop.permute.xlu0 %241
    %v244 = vsel %vm239, %v242, 0.0
    %246 = vrot.lane.b32.xlu0 %v231, 96
    %v247 = vpop.permute.xlu0 %246
    %v249 = vsel %vm239, %v247, 0.0
    %v250 = vpack.c.bf16 %v244, %v244
    %vm251 = vcmask 257024
    %252 = vst.msk [vmem:[#allocation3] sm:$0xf] %vm251, %v250
    %s253 = scalar_lea.vmem [#allocation2], 8
    %v254 = vld [vmem:[%s253] sm:$0xff]
    %v256 = vsel %vm67, %v250, 0
    %258 = vmatprep.subr.bf16.mxu0 0
    %259 = vmatpush1.bf16.msra.mxu0 0
    %260 = vmatprep.subr.bf16.mxu0 0
    %261 = vmatpush1.bf16.msra.mxu0 0
    %262 = vmatprep.subr.bf16.mxu0 0
    %263 = vmatpush1.bf16.msra.mxu0 0
    %264 = vmatprep.subr.bf16.mxu0 0
    %265 = vmatpush1.bf16.msra.mxu0 0
    %266 = vmatprep.subr.bf16.mxu0 0
    %267 = vmatpush1.bf16.msra.mxu0 0
    %268 = vmatprep.subr.bf16.mxu0 0
    %269 = vmatpush1.bf16.msra.mxu0 0
    %270 = vmatprep.subr.bf16.mxu0 0
    %271 = vmatpush1.bf16.msra.mxu0 %v167
    %272 = vmatprep.subr.bf16.mxu0 0
    %273 = vmatpush1.bf16.msra.mxu0 %v166
    %274 = vmatprep.subr.bf16.mxu0 0
    %275 = vmatpush2.bf16.msra.mxu0 0
    %276 = vmatprep.subr.bf16.mxu0 0
    %277 = vmatpush2.bf16.msra.mxu0 0
    %278 = vmatprep.subr.bf16.mxu0 0
    %279 = vmatpush2.bf16.msra.mxu0 0
    %280 = vmatprep.subr.bf16.mxu0 0
    %281 = vmatpush2.bf16.msra.mxu0 0
    %282 = vmatprep.subr.bf16.mxu0 0
    %283 = vmatpush2.bf16.msra.mxu0 0
    %284 = vmatprep.subr.bf16.mxu0 0
    %285 = vmatpush2.bf16.msra.mxu0 0
    %286 = vmatprep.subr.bf16.mxu0 0
    %287 = vmatpush2.bf16.msra.mxu0 0
    %288 = vmatprep.subr.bf16.mxu0 0
    %289 = vmatpush2.bf16.msra.mxu0 0
    %290 = vmatprep.mubr.bf16.mxu0 0
    %291 = vmatmul.mubr.bf16.gmra.mxu0 %v256
    %v292 = vpop.f32.mrf.mxu0
    %v293 = vadd.f32 0.0, %v292
    %v294 = vpop.f32.mrf.mxu0
    %v295 = vpop.f32.mrf.mxu0
    %v296 = vpop.f32.mrf.mxu0
    %297 = vdwg.mxu0
    %v298 = vadd.f32 %v254, %v293
    %v299 = vxor.u32 %v298, 2147483648
    %v300 = vmul.f32 %v299, 1.442695
    %v301 = vpow.pop %v300
    %v302 = vadd.f32 %v301, 1.0
    %v303 = vrcp.pop %v302
    %v304 = vmul.f32 1.0, %v303
    %v305 = vtanh.pop %v298
    %307 = vrot.lane.b32.xlu0 %v249, 32
    %v308 = vpop.permute.xlu0 %307
    %v310 = vmul.f32 %v304, %v308
    %312 = vrot.lane.b32.xlu0 %v305, 32
    %v313 = vpop.permute.xlu0 %312
    %v315 = vmul.f32 %v304, %v313
    %317 = vrot.lane.b32.xlu0 %v315, 32
    %v318 = vpop.permute.xlu0 %317
    %v320 = vadd.f32 %v310, %v318
    %v321 = vtanh.pop %v320
    %323 = vrot.lane.b32.xlu0 %v321, 32
    %v324 = vpop.permute.xlu0 %323
    %v326 = vmul.f32 %v304, %v324
    %s327 = scalar_lea.vmem %s1, 8
    %v328 = vld [vmem:[%s327] sm:$0xff]
    %vm329 = vcmp.gt.f32.partialorder %v328, 0.0
    %331 = vrot.lane.b32.xlu0 %v326, 64
    %v332 = vpop.permute.xlu0 %331
    %v334 = vsel %vm329, %v332, %v244
    %336 = vrot.lane.b32.xlu0 %v320, 96
    %v337 = vpop.permute.xlu0 %336
    %v339 = vsel %vm329, %v337, %v249
    %v340 = vsel %vm329, %v332, 0.0
    %v341 = vpack.c.bf16 %v340, %v340
    %s342 = scalar_lea.vmem [#allocation3], 4
    %343 = vst.msk [vmem:[%s342] sm:$0xf] %vm251, %v341
    %s344 = scalar_lea.vmem [#allocation2], 16
    %v345 = vld [vmem:[%s344] sm:$0xff]
    %v346 = vpack.c.bf16 %v334, %v334
    %v348 = vsel %vm67, %v346, 0
    %350 = vmatprep.subr.bf16.mxu0 0
    %351 = vmatpush1.bf16.msra.mxu0 0
    %352 = vmatprep.subr.bf16.mxu0 0
    %353 = vmatpush1.bf16.msra.mxu0 0
    %354 = vmatprep.subr.bf16.mxu0 0
    %355 = vmatpush1.bf16.msra.mxu0 0
    %356 = vmatprep.subr.bf16.mxu0 0
    %357 = vmatpush1.bf16.msra.mxu0 0
    %358 = vmatprep.subr.bf16.mxu0 0
    %359 = vmatpush1.bf16.msra.mxu0 0
    %360 = vmatprep.subr.bf16.mxu0 0
    %361 = vmatpush1.bf16.msra.mxu0 0
    %362 = vmatprep.subr.bf16.mxu0 0
    %363 = vmatpush1.bf16.msra.mxu0 %v167
    %364 = vmatprep.subr.bf16.mxu0 0
    %365 = vmatpush1.bf16.msra.mxu0 %v166
    %366 = vmatprep.subr.bf16.mxu0 0
    %367 = vmatpush2.bf16.msra.mxu0 0
    %368 = vmatprep.subr.bf16.mxu0 0
    %369 = vmatpush2.bf16.msra.mxu0 0
    %370 = vmatprep.subr.bf16.mxu0 0
    %371 = vmatpush2.bf16.msra.mxu0 0
    %372 = vmatprep.subr.bf16.mxu0 0
    %373 = vmatpush2.bf16.msra.mxu0 0
    %374 = vmatprep.subr.bf16.mxu0 0
    %375 = vmatpush2.bf16.msra.mxu0 0
    %376 = vmatprep.subr.bf16.mxu0 0
    %377 = vmatpush2.bf16.msra.mxu0 0
    %378 = vmatprep.subr.bf16.mxu0 0
    %379 = vmatpush2.bf16.msra.mxu0 0
    %380 = vmatprep.subr.bf16.mxu0 0
    %381 = vmatpush2.bf16.msra.mxu0 0
    %382 = vmatprep.mubr.bf16.mxu0 0
    %383 = vmatmul.mubr.bf16.gmra.mxu0 %v348
    %v384 = vpop.f32.mrf.mxu0
    %v385 = vadd.f32 0.0, %v384
    %v386 = vpop.f32.mrf.mxu0
    %v387 = vpop.f32.mrf.mxu0
    %v388 = vpop.f32.mrf.mxu0
    %389 = vdwg.mxu0
    %v390 = vadd.f32 %v345, %v385
    %v391 = vxor.u32 %v390, 2147483648
    %v392 = vmul.f32 %v391, 1.442695
    %v393 = vpow.pop %v392
    %v394 = vadd.f32 %v393, 1.0
    %v395 = vrcp.pop %v394
    %v396 = vmul.f32 1.0, %v395
    %v397 = vtanh.pop %v390
    %399 = vrot.lane.b32.xlu0 %v339, 32
    %v400 = vpop.permute.xlu0 %399
    %v402 = vmul.f32 %v396, %v400
    %404 = vrot.lane.b32.xlu0 %v397, 32
    %v405 = vpop.permute.xlu0 %404
    %v407 = vmul.f32 %v396, %v405
    %409 = vrot.lane.b32.xlu0 %v407, 32
    %v410 = vpop.permute.xlu0 %409
    %v412 = vadd.f32 %v402, %v410
    %v413 = vtanh.pop %v412
    %415 = vrot.lane.b32.xlu0 %v413, 32
    %v416 = vpop.permute.xlu0 %415
    %v418 = vmul.f32 %v396, %v416
    %s419 = scalar_lea.vmem %s1, 16
    %v420 = vld [vmem:[%s419] sm:$0xff]
    %vm421 = vcmp.gt.f32.partialorder %v420, 0.0
    %423 = vrot.lane.b32.xlu0 %v418, 64
    %v424 = vpop.permute.xlu0 %423
    %v426 = vsel %vm421, %v424, %v334
    %428 = vrot.lane.b32.xlu0 %v412, 96
    %v429 = vpop.permute.xlu0 %428
    %v431 = vsel %vm421, %v429, %v339
    %v432 = vsel %vm421, %v424, 0.0
    %v433 = vpack.c.bf16 %v432, %v432
    %s434 = scalar_lea.vmem [#allocation3], 8
    %435 = vst.msk [vmem:[%s434] sm:$0xf] %vm251, %v433
    %s436 = scalar_lea.vmem [#allocation2], 24
    %v437 = vld [vmem:[%s436] sm:$0xff]
    %v438 = vpack.c.bf16 %v426, %v426
    %v440 = vsel %vm67, %v438, 0
    %442 = vmatprep.subr.bf16.mxu0 0
    %443 = vmatpush1.bf16.msra.mxu0 0
    %444 = vmatprep.subr.bf16.mxu0 0
    %445 = vmatpush1.bf16.msra.mxu0 0
    %446 = vmatprep.subr.bf16.mxu0 0
    %447 = vmatpush1.bf16.msra.mxu0 0
    %448 = vmatprep.subr.bf16.mxu0 0
    %449 = vmatpush1.bf16.msra.mxu0 0
    %450 = vmatprep.subr.bf16.mxu0 0
    %451 = vmatpush1.bf16.msra.mxu0 0
    %452 = vmatprep.subr.bf16.mxu0 0
    %453 = vmatpush1.bf16.msra.mxu0 0
    %454 = vmatprep.subr.bf16.mxu0 0
    %455 = vmatpush1.bf16.msra.mxu0 %v167
    %456 = vmatprep.subr.bf16.mxu0 0
    %457 = vmatpush1.bf16.msra.mxu0 %v166
    %458 = vmatprep.subr.bf16.mxu0 0
    %459 = vmatpush2.bf16.msra.mxu0 0
    %460 = vmatprep.subr.bf16.mxu0 0
    %461 = vmatpush2.bf16.msra.mxu0 0
    %462 = vmatprep.subr.bf16.mxu0 0
    %463 = vmatpush2.bf16.msra.mxu0 0
    %464 = vmatprep.subr.bf16.mxu0 0
    %465 = vmatpush2.bf16.msra.mxu0 0
    %466 = vmatprep.subr.bf16.mxu0 0
    %467 = vmatpush2.bf16.msra.mxu0 0
    %468 = vmatprep.subr.bf16.mxu0 0
    %469 = vmatpush2.bf16.msra.mxu0 0
    %470 = vmatprep.subr.bf16.mxu0 0
    %471 = vmatpush2.bf16.msra.mxu0 0
    %472 = vmatprep.subr.bf16.mxu0 0
    %473 = vmatpush2.bf16.msra.mxu0 0
    %474 = vmatprep.mubr.bf16.mxu0 0
    %475 = vmatmul.mubr.bf16.gmra.mxu0 %v440
    %v476 = vpop.f32.mrf.mxu0
    %v477 = vadd.f32 0.0, %v476
    %v478 = vpop.f32.mrf.mxu0
    %v479 = vpop.f32.mrf.mxu0
    %v480 = vpop.f32.mrf.mxu0
    %481 = vdwg.mxu0
    %v482 = vadd.f32 %v437, %v477
    %v483 = vxor.u32 %v482, 2147483648
    %v484 = vmul.f32 %v483, 1.442695
    %v485 = vpow.pop %v484
    %v486 = vadd.f32 %v485, 1.0
    %v487 = vrcp.pop %v486
    %v488 = vmul.f32 1.0, %v487
    %v489 = vtanh.pop %v482
    %491 = vrot.lane.b32.xlu0 %v431, 32
    %v492 = vpop.permute.xlu0 %491
    %v494 = vmul.f32 %v488, %v492
    %496 = vrot.lane.b32.xlu0 %v489, 32
    %v497 = vpop.permute.xlu0 %496
    %v499 = vmul.f32 %v488, %v497
    %501 = vrot.lane.b32.xlu0 %v499, 32
    %v502 = vpop.permute.xlu0 %501
    %v504 = vadd.f32 %v494, %v502
    %v505 = vtanh.pop %v504
    %507 = vrot.lane.b32.xlu0 %v505, 32
    %v508 = vpop.permute.xlu0 %507
    %v510 = vmul.f32 %v488, %v508
    %s511 = scalar_lea.vmem %s1, 24
    %v512 = vld [vmem:[%s511] sm:$0xff]
    %vm513 = vcmp.gt.f32.partialorder %v512, 0.0
    %515 = vrot.lane.b32.xlu0 %v510, 64
    %v516 = vpop.permute.xlu0 %515
    %v518 = vsel %vm513, %v516, %v426
    %520 = vrot.lane.b32.xlu0 %v504, 96
    %v521 = vpop.permute.xlu0 %520
    %v523 = vsel %vm513, %v521, %v431
    %v524 = vsel %vm513, %v516, 0.0
    %v525 = vpack.c.bf16 %v524, %v524
    %s526 = scalar_lea.vmem [#allocation3], 12
    %527 = vst.msk [vmem:[%s526] sm:$0xf] %vm251, %v525
    %s528 = scalar_lea.vmem [#allocation2], 32
    %v529 = vld [vmem:[%s528] sm:$0xff]
    %v530 = vpack.c.bf16 %v518, %v518
    %v532 = vsel %vm67, %v530, 0
    %534 = vmatprep.subr.bf16.mxu0 0
    %535 = vmatpush1.bf16.msra.mxu0 0
    %536 = vmatprep.subr.bf16.mxu0 0
    %537 = vmatpush1.bf16.msra.mxu0 0
    %538 = vmatprep.subr.bf16.mxu0 0
    %539 = vmatpush1.bf16.msra.mxu0 0
    %540 = vmatprep.subr.bf16.mxu0 0
    %541 = vmatpush1.bf16.msra.mxu0 0
    %542 = vmatprep.subr.bf16.mxu0 0
    %543 = vmatpush1.bf16.msra.mxu0 0
    %544 = vmatprep.subr.bf16.mxu0 0
    %545 = vmatpush1.bf16.msra.mxu0 0
    %546 = vmatprep.subr.bf16.mxu0 0
    %547 = vmatpush1.bf16.msra.mxu0 %v167
    %548 = vmatprep.subr.bf16.mxu0 0
    %549 = vmatpush1.bf16.msra.mxu0 %v166
    %550 = vmatprep.subr.bf16.mxu0 0
    %551 = vmatpush2.bf16.msra.mxu0 0
    %552 = vmatprep.subr.bf16.mxu0 0
    %553 = vmatpush2.bf16.msra.mxu0 0
    %554 = vmatprep.subr.bf16.mxu0 0
    %555 = vmatpush2.bf16.msra.mxu0 0
    %556 = vmatprep.subr.bf16.mxu0 0
    %557 = vmatpush2.bf16.msra.mxu0 0
    %558 = vmatprep.subr.bf16.mxu0 0
    %559 = vmatpush2.bf16.msra.mxu0 0
    %560 = vmatprep.subr.bf16.mxu0 0
    %561 = vmatpush2.bf16.msra.mxu0 0
    %562 = vmatprep.subr.bf16.mxu0 0
    %563 = vmatpush2.bf16.msra.mxu0 0
    %564 = vmatprep.subr.bf16.mxu0 0
    %565 = vmatpush2.bf16.msra.mxu0 0
    %566 = vmatprep.mubr.bf16.mxu0 0
    %567 = vmatmul.mubr.bf16.gmra.mxu0 %v532
    %v568 = vpop.f32.mrf.mxu0
    %v569 = vadd.f32 0.0, %v568
    %v570 = vpop.f32.mrf.mxu0
    %v571 = vpop.f32.mrf.mxu0
    %v572 = vpop.f32.mrf.mxu0
    %573 = vdwg.mxu0
    %v574 = vadd.f32 %v529, %v569
    %v575 = vxor.u32 %v574, 2147483648
    %v576 = vmul.f32 %v575, 1.442695
    %v577 = vpow.pop %v576
    %v578 = vadd.f32 %v577, 1.0
    %v579 = vrcp.pop %v578
    %v580 = vmul.f32 1.0, %v579
    %v581 = vtanh.pop %v574
    %583 = vrot.lane.b32.xlu0 %v523, 32
    %v584 = vpop.permute.xlu0 %583
    %v586 = vmul.f32 %v580, %v584
    %588 = vrot.lane.b32.xlu0 %v581, 32
    %v589 = vpop.permute.xlu0 %588
    %v591 = vmul.f32 %v580, %v589
    %593 = vrot.lane.b32.xlu0 %v591, 32
    %v594 = vpop.permute.xlu0 %593
    %v596 = vadd.f32 %v586, %v594
    %v597 = vtanh.pop %v596
    %599 = vrot.lane.b32.xlu0 %v597, 32
    %v600 = vpop.permute.xlu0 %599
    %v602 = vmul.f32 %v580, %v600
    %s603 = scalar_lea.vmem %s1, 32
    %v604 = vld [vmem:[%s603] sm:$0xff]
    %vm605 = vcmp.gt.f32.partialorder %v604, 0.0
    %607 = vrot.lane.b32.xlu0 %v602, 64
    %v608 = vpop.permute.xlu0 %607
    %v610 = vsel %vm605, %v608, %v518
    %612 = vrot.lane.b32.xlu0 %v596, 96
    %v613 = vpop.permute.xlu0 %612
    %v615 = vsel %vm605, %v613, %v523
    %v616 = vsel %vm605, %v608, 0.0
    %v617 = vpack.c.bf16 %v616, %v616
    %s618 = scalar_lea.vmem [#allocation3], 16
    %619 = vst.msk [vmem:[%s618] sm:$0xf] %vm251, %v617
    %s620 = scalar_lea.vmem [#allocation2], 40
    %v621 = vld [vmem:[%s620] sm:$0xff]
    %v622 = vpack.c.bf16 %v610, %v610
    %v624 = vsel %vm67, %v622, 0
    %626 = vmatprep.subr.bf16.mxu0 0
    %627 = vmatpush1.bf16.msra.mxu0 0
    %628 = vmatprep.subr.bf16.mxu0 0
    %629 = vmatpush1.bf16.msra.mxu0 0
    %630 = vmatprep.subr.bf16.mxu0 0
    %631 = vmatpush1.bf16.msra.mxu0 0
    %632 = vmatprep.subr.bf16.mxu0 0
    %633 = vmatpush1.bf16.msra.mxu0 0
    %634 = vmatprep.subr.bf16.mxu0 0
    %635 = vmatpush1.bf16.msra.mxu0 0
    %636 = vmatprep.subr.bf16.mxu0 0
    %637 = vmatpush1.bf16.msra.mxu0 0
    %638 = vmatprep.subr.bf16.mxu0 0
    %639 = vmatpush1.bf16.msra.mxu0 %v167
    %640 = vmatprep.subr.bf16.mxu0 0
    %641 = vmatpush1.bf16.msra.mxu0 %v166
    %642 = vmatprep.subr.bf16.mxu0 0
    %643 = vmatpush2.bf16.msra.mxu0 0
    %644 = vmatprep.subr.bf16.mxu0 0
    %645 = vmatpush2.bf16.msra.mxu0 0
    %646 = vmatprep.subr.bf16.mxu0 0
    %647 = vmatpush2.bf16.msra.mxu0 0
    %648 = vmatprep.subr.bf16.mxu0 0
    %649 = vmatpush2.bf16.msra.mxu0 0
    %650 = vmatprep.subr.bf16.mxu0 0
    %651 = vmatpush2.bf16.msra.mxu0 0
    %652 = vmatprep.subr.bf16.mxu0 0
    %653 = vmatpush2.bf16.msra.mxu0 0
    %654 = vmatprep.subr.bf16.mxu0 0
    %655 = vmatpush2.bf16.msra.mxu0 0
    %656 = vmatprep.subr.bf16.mxu0 0
    %657 = vmatpush2.bf16.msra.mxu0 0
    %658 = vmatprep.mubr.bf16.mxu0 0
    %659 = vmatmul.mubr.bf16.gmra.mxu0 %v624
    %v660 = vpop.f32.mrf.mxu0
    %v661 = vadd.f32 0.0, %v660
    %v662 = vpop.f32.mrf.mxu0
    %v663 = vpop.f32.mrf.mxu0
    %v664 = vpop.f32.mrf.mxu0
    %665 = vdwg.mxu0
    %v666 = vadd.f32 %v621, %v661
    %v667 = vxor.u32 %v666, 2147483648
    %v668 = vmul.f32 %v667, 1.442695
    %v669 = vpow.pop %v668
    %v670 = vadd.f32 %v669, 1.0
    %v671 = vrcp.pop %v670
    %v672 = vmul.f32 1.0, %v671
    %v673 = vtanh.pop %v666
    %675 = vrot.lane.b32.xlu0 %v615, 32
    %v676 = vpop.permute.xlu0 %675
    %v678 = vmul.f32 %v672, %v676
    %680 = vrot.lane.b32.xlu0 %v673, 32
    %v681 = vpop.permute.xlu0 %680
    %v683 = vmul.f32 %v672, %v681
    %685 = vrot.lane.b32.xlu0 %v683, 32
    %v686 = vpop.permute.xlu0 %685
    %v688 = vadd.f32 %v678, %v686
    %v689 = vtanh.pop %v688
    %691 = vrot.lane.b32.xlu0 %v689, 32
    %v692 = vpop.permute.xlu0 %691
    %v694 = vmul.f32 %v672, %v692
    %s695 = scalar_lea.vmem %s1, 40
    %v696 = vld [vmem:[%s695] sm:$0xff]
    %vm697 = vcmp.gt.f32.partialorder %v696, 0.0
    %699 = vrot.lane.b32.xlu0 %v694, 64
    %v700 = vpop.permute.xlu0 %699
    %v702 = vsel %vm697, %v700, %v610
    %704 = vrot.lane.b32.xlu0 %v688, 96
    %v705 = vpop.permute.xlu0 %704
    %v707 = vsel %vm697, %v705, %v615
    %v708 = vsel %vm697, %v700, 0.0
    %v709 = vpack.c.bf16 %v708, %v708
    %s710 = scalar_lea.vmem [#allocation3], 20
    %711 = vst.msk [vmem:[%s710] sm:$0xf] %vm251, %v709
    %s712 = scalar_lea.vmem [#allocation2], 48
    %v713 = vld [vmem:[%s712] sm:$0xff]
    %v714 = vpack.c.bf16 %v702, %v702
    %v716 = vsel %vm67, %v714, 0
    %718 = vmatprep.subr.bf16.mxu0 0
    %719 = vmatpush1.bf16.msra.mxu0 0
    %720 = vmatprep.subr.bf16.mxu0 0
    %721 = vmatpush1.bf16.msra.mxu0 0
    %722 = vmatprep.subr.bf16.mxu0 0
    %723 = vmatpush1.bf16.msra.mxu0 0
    %724 = vmatprep.subr.bf16.mxu0 0
    %725 = vmatpush1.bf16.msra.mxu0 0
    %726 = vmatprep.subr.bf16.mxu0 0
    %727 = vmatpush1.bf16.msra.mxu0 0
    %728 = vmatprep.subr.bf16.mxu0 0
    %729 = vmatpush1.bf16.msra.mxu0 0
    %730 = vmatprep.subr.bf16.mxu0 0
    %731 = vmatpush1.bf16.msra.mxu0 %v167
    %732 = vmatprep.subr.bf16.mxu0 0
    %733 = vmatpush1.bf16.msra.mxu0 %v166
    %734 = vmatprep.subr.bf16.mxu0 0
    %735 = vmatpush2.bf16.msra.mxu0 0
    %736 = vmatprep.subr.bf16.mxu0 0
    %737 = vmatpush2.bf16.msra.mxu0 0
    %738 = vmatprep.subr.bf16.mxu0 0
    %739 = vmatpush2.bf16.msra.mxu0 0
    %740 = vmatprep.subr.bf16.mxu0 0
    %741 = vmatpush2.bf16.msra.mxu0 0
    %742 = vmatprep.subr.bf16.mxu0 0
    %743 = vmatpush2.bf16.msra.mxu0 0
    %744 = vmatprep.subr.bf16.mxu0 0
    %745 = vmatpush2.bf16.msra.mxu0 0
    %746 = vmatprep.subr.bf16.mxu0 0
    %747 = vmatpush2.bf16.msra.mxu0 0
    %748 = vmatprep.subr.bf16.mxu0 0
    %749 = vmatpush2.bf16.msra.mxu0 0
    %750 = vmatprep.mubr.bf16.mxu0 0
    %751 = vmatmul.mubr.bf16.gmra.mxu0 %v716
    %v752 = vpop.f32.mrf.mxu0
    %v753 = vadd.f32 0.0, %v752
    %v754 = vpop.f32.mrf.mxu0
    %v755 = vpop.f32.mrf.mxu0
    %v756 = vpop.f32.mrf.mxu0
    %757 = vdwg.mxu0
    %v758 = vadd.f32 %v713, %v753
    %v759 = vxor.u32 %v758, 2147483648
    %v760 = vmul.f32 %v759, 1.442695
    %v761 = vpow.pop %v760
    %v762 = vadd.f32 %v761, 1.0
    %v763 = vrcp.pop %v762
    %v764 = vmul.f32 1.0, %v763
    %v765 = vtanh.pop %v758
    %767 = vrot.lane.b32.xlu0 %v707, 32
    %v768 = vpop.permute.xlu0 %767
    %v770 = vmul.f32 %v764, %v768
    %772 = vrot.lane.b32.xlu0 %v765, 32
    %v773 = vpop.permute.xlu0 %772
    %v775 = vmul.f32 %v764, %v773
    %777 = vrot.lane.b32.xlu0 %v775, 32
    %v778 = vpop.permute.xlu0 %777
    %v780 = vadd.f32 %v770, %v778
    %v781 = vtanh.pop %v780
    %783 = vrot.lane.b32.xlu0 %v781, 32
    %v784 = vpop.permute.xlu0 %783
    %v786 = vmul.f32 %v764, %v784
    %s787 = scalar_lea.vmem %s1, 48
    %v788 = vld [vmem:[%s787] sm:$0xff]
    %vm789 = vcmp.gt.f32.partialorder %v788, 0.0
    %791 = vrot.lane.b32.xlu0 %v786, 64
    %v792 = vpop.permute.xlu0 %791
    %v794 = vsel %vm789, %v792, %v702
    %796 = vrot.lane.b32.xlu0 %v780, 96
    %v797 = vpop.permute.xlu0 %796
    %v799 = vsel %vm789, %v797, %v707
    %v800 = vsel %vm789, %v792, 0.0
    %v801 = vpack.c.bf16 %v800, %v800
    %s802 = scalar_lea.vmem [#allocation3], 24
    %803 = vst.msk [vmem:[%s802] sm:$0xf] %vm251, %v801
    %s804 = scalar_lea.vmem [#allocation2], 56
    %v805 = vld [vmem:[%s804] sm:$0xff]
    %v806 = vpack.c.bf16 %v794, %v794
    %v808 = vsel %vm67, %v806, 0
    %810 = vmatprep.subr.bf16.mxu0 0
    %811 = vmatpush1.bf16.msra.mxu0 0
    %812 = vmatprep.subr.bf16.mxu0 0
    %813 = vmatpush1.bf16.msra.mxu0 0
    %814 = vmatprep.subr.bf16.mxu0 0
    %815 = vmatpush1.bf16.msra.mxu0 0
    %816 = vmatprep.subr.bf16.mxu0 0
    %817 = vmatpush1.bf16.msra.mxu0 0
    %818 = vmatprep.subr.bf16.mxu0 0
    %819 = vmatpush1.bf16.msra.mxu0 0
    %820 = vmatprep.subr.bf16.mxu0 0
    %821 = vmatpush1.bf16.msra.mxu0 0
    %822 = vmatprep.subr.bf16.mxu0 0
    %823 = vmatpush1.bf16.msra.mxu0 %v167
    %824 = vmatprep.subr.bf16.mxu0 0
    %825 = vmatpush1.bf16.msra.mxu0 %v166
    %826 = vmatprep.subr.bf16.mxu0 0
    %827 = vmatpush2.bf16.msra.mxu0 0
    %828 = vmatprep.subr.bf16.mxu0 0
    %829 = vmatpush2.bf16.msra.mxu0 0
    %830 = vmatprep.subr.bf16.mxu0 0
    %831 = vmatpush2.bf16.msra.mxu0 0
    %832 = vmatprep.subr.bf16.mxu0 0
    %833 = vmatpush2.bf16.msra.mxu0 0
    %834 = vmatprep.subr.bf16.mxu0 0
    %835 = vmatpush2.bf16.msra.mxu0 0
    %836 = vmatprep.subr.bf16.mxu0 0
    %837 = vmatpush2.bf16.msra.mxu0 0
    %838 = vmatprep.subr.bf16.mxu0 0
    %839 = vmatpush2.bf16.msra.mxu0 0
    %840 = vmatprep.subr.bf16.mxu0 0
    %841 = vmatpush2.bf16.msra.mxu0 0
    %842 = vmatprep.mubr.bf16.mxu0 0
    %843 = vmatmul.mubr.bf16.gmra.mxu0 %v808
    %v844 = vpop.f32.mrf.mxu0
    %v845 = vadd.f32 0.0, %v844
    %v846 = vpop.f32.mrf.mxu0
    %v847 = vpop.f32.mrf.mxu0
    %v848 = vpop.f32.mrf.mxu0
    %849 = vdwg.mxu0
    %v850 = vadd.f32 %v805, %v845
    %v851 = vxor.u32 %v850, 2147483648
    %v852 = vmul.f32 %v851, 1.442695
    %v853 = vpow.pop %v852
    %v854 = vadd.f32 %v853, 1.0
    %v855 = vrcp.pop %v854
    %v856 = vmul.f32 1.0, %v855
    %v857 = vtanh.pop %v850
    %859 = vrot.lane.b32.xlu0 %v799, 32
    %v860 = vpop.permute.xlu0 %859
    %v862 = vmul.f32 %v856, %v860
    %864 = vrot.lane.b32.xlu0 %v857, 32
    %v865 = vpop.permute.xlu0 %864
    %v867 = vmul.f32 %v856, %v865
    %869 = vrot.lane.b32.xlu0 %v867, 32
    %v870 = vpop.permute.xlu0 %869
    %v872 = vadd.f32 %v862, %v870
    %v873 = vtanh.pop %v872
    %875 = vrot.lane.b32.xlu0 %v873, 32
    %v876 = vpop.permute.xlu0 %875
    %v878 = vmul.f32 %v856, %v876
    %s879 = scalar_lea.vmem %s1, 56
    %v880 = vld [vmem:[%s879] sm:$0xff]
    %vm881 = vcmp.gt.f32.partialorder %v880, 0.0
    %883 = vrot.lane.b32.xlu0 %v878, 64
    %v884 = vpop.permute.xlu0 %883
    %v886 = vsel %vm881, %v884, %v794
    %888 = vrot.lane.b32.xlu0 %v872, 96
    %v889 = vpop.permute.xlu0 %888
    %v891 = vsel %vm881, %v889, %v799
    %v892 = vsel %vm881, %v884, 0.0
    %v893 = vpack.c.bf16 %v892, %v892
    %s894 = scalar_lea.vmem [#allocation3], 28
    %895 = vst.msk [vmem:[%s894] sm:$0xf] %vm251, %v893
    %896 = vst.msk [vmem:[#allocation4] sm:$0xff] %vm67, %v886
    %897 = vst.msk [vmem:[#allocation6] sm:$0xff] %vm67, %v891
    %v898 = vld [vmem:[#allocation3] sm:$0xf]
    %v899 = vld [vmem:[#allocation3 + $0x4] sm:$0xf]
    %v900 = vld [vmem:[#allocation3 + $0x8] sm:$0xf]
    %v901 = vld [vmem:[#allocation3 + $0xc] sm:$0xf]
    %v902 = vld [vmem:[#allocation3 + $0x10] sm:$0xf]
    %v903 = vld [vmem:[#allocation3 + $0x14] sm:$0xf]
    %v904 = vld [vmem:[#allocation3 + $0x18] sm:$0xf]
    %v905 = vld [vmem:[#allocation3 + $0x1c] sm:$0xf]
    %s906 = scalar_lea.vmem %s2, 16
    %v907 = vld [vmem:[%s906] sm:$0xf]
    %v908 = vld [vmem:[%s906 + $0x4] sm:$0xf]
    %v909 = vld [vmem:[%s906 + $0x8] sm:$0xf]
    %v910 = vld [vmem:[%s906 + $0xc] sm:$0xf]
    %v919 = vunpack.c.l.b16 %v898
    %v920 = vunpack.c.l.b16 %v899
    %v921 = vunpack.c.l.b16 %v900
    %v922 = vunpack.c.l.b16 %v901
    %v923 = vunpack.c.l.b16 %v902
    %v924 = vunpack.c.l.b16 %v903
    %v925 = vunpack.c.l.b16 %v904
    %v926 = vunpack.c.l.b16 %v905
    %v927 = vpack.c.b16 %v920, %v919
    %v928 = vpack.c.b16 %v922, %v921
    %v929 = vpack.c.b16 %v924, %v923
    %v930 = vpack.c.b16 %v926, %v925
    %v935 = vunpack.c.l.b16 %v907
    %v936 = vunpack.c.l.b16 %v908
    %v937 = vunpack.c.l.b16 %v909
    %v938 = vunpack.c.l.b16 %v910
    %v939 = vpack.c.b16 %v936, %v935
    %v940 = vpack.c.b16 %v938, %v937
    %v944 = vsel %vm67, %v927, 0
    %v947 = vsel %vm67, %v928, 0
    %v950 = vsel %vm67, %v929, 0
    %v953 = vsel %vm67, %v930, 0
    %955 = vmatprep.subr.bf16.mxu0 0
    %956 = vmatpush1.bf16.msra.mxu0 0
    %957 = vmatprep.subr.bf16.mxu0 0
    %958 = vmatpush1.bf16.msra.mxu0 0
    %959 = vmatprep.subr.bf16.mxu0 0
    %960 = vmatpush1.bf16.msra.mxu0 0
    %961 = vmatprep.subr.bf16.mxu0 0
    %962 = vmatpush1.bf16.msra.mxu0 0
    %963 = vmatprep.subr.bf16.mxu0 0
    %964 = vmatpush1.bf16.msra.mxu0 0
    %965 = vmatprep.subr.bf16.mxu0 0
    %966 = vmatpush1.bf16.msra.mxu0 0
    %967 = vmatprep.subr.bf16.mxu0 0
    %968 = vmatpush1.bf16.msra.mxu0 %v940
    %969 = vmatprep.subr.bf16.mxu0 0
    %970 = vmatpush1.bf16.msra.mxu0 %v939
    %971 = vmatprep.subr.bf16.mxu0 0
    %972 = vmatpush2.bf16.msra.mxu0 0
    %973 = vmatprep.subr.bf16.mxu0 0
    %974 = vmatpush2.bf16.msra.mxu0 0
    %975 = vmatprep.subr.bf16.mxu0 0
    %976 = vmatpush2.bf16.msra.mxu0 0
    %977 = vmatprep.subr.bf16.mxu0 0
    %978 = vmatpush2.bf16.msra.mxu0 0
    %979 = vmatprep.subr.bf16.mxu0 0
    %980 = vmatpush2.bf16.msra.mxu0 0
    %981 = vmatprep.subr.bf16.mxu0 0
    %982 = vmatpush2.bf16.msra.mxu0 0
    %983 = vmatprep.subr.bf16.mxu0 0
    %984 = vmatpush2.bf16.msra.mxu0 0
    %985 = vmatprep.subr.bf16.mxu0 0
    %986 = vmatpush2.bf16.msra.mxu0 0
    %987 = vmatprep.mubr.bf16.mxu0 0
    %988 = vmatmul.mubr.bf16.gmra.mxu0 %v944
    %v989 = vpop.f32.mrf.mxu0
    %v990 = vadd.f32 0.0, %v989
    %v991 = vpop.f32.mrf.mxu0
    %v992 = vpop.f32.mrf.mxu0
    %v993 = vadd.f32 0.0, %v992
    %v994 = vpop.f32.mrf.mxu0
    %995 = vmatprep.mubr.bf16.mxu0 0
    %996 = vmatmul.mubr.bf16.gmra.mxu0 %v947
    %v997 = vpop.f32.mrf.mxu0
    %v998 = vadd.f32 0.0, %v997
    %v999 = vpop.f32.mrf.mxu0
    %v1000 = vpop.f32.mrf.mxu0
    %v1001 = vadd.f32 0.0, %v1000
    %v1002 = vpop.f32.mrf.mxu0
    %1003 = vmatprep.mubr.bf16.mxu0 0
    %1004 = vmatmul.mubr.bf16.gmra.mxu0 %v950
    %v1005 = vpop.f32.mrf.mxu0
    %v1006 = vadd.f32 0.0, %v1005
    %v1007 = vpop.f32.mrf.mxu0
    %v1008 = vpop.f32.mrf.mxu0
    %v1009 = vadd.f32 0.0, %v1008
    %v1010 = vpop.f32.mrf.mxu0
    %1011 = vmatprep.mubr.bf16.mxu0 0
    %1012 = vmatmul.mubr.bf16.gmra.mxu0 %v953
    %v1013 = vpop.f32.mrf.mxu0
    %v1014 = vadd.f32 0.0, %v1013
    %v1015 = vpop.f32.mrf.mxu0
    %v1016 = vpop.f32.mrf.mxu0
    %v1017 = vadd.f32 0.0, %v1016
    %v1018 = vpop.f32.mrf.mxu0
    %1019 = vdwg.mxu0
    %1020 = vst [vmem:[#allocation2] sm:$0xff] %v990
    %1021 = vst [vmem:[#allocation2 + $0x8] sm:$0xff] %v993
    %1022 = vst [vmem:[#allocation2 + $0x10] sm:$0xff] %v998
    %1023 = vst [vmem:[#allocation2 + $0x18] sm:$0xff] %v1001
    %1024 = vst [vmem:[#allocation2 + $0x20] sm:$0xff] %v1006
    %1025 = vst [vmem:[#allocation2 + $0x28] sm:$0xff] %v1009
    %1026 = vst [vmem:[#allocation2 + $0x30] sm:$0xff] %v1014
    %1027 = vst [vmem:[#allocation2 + $0x38] sm:$0xff] %v1017
    %s1028 = scalar_lea.vmem %s3, 16
    %v1029 = vld [vmem:[%s1028] sm:$0xf]
    %v1030 = vld [vmem:[%s1028 + $0x4] sm:$0xf]
    %v1031 = vld [vmem:[%s1028 + $0x8] sm:$0xf]
    %v1032 = vld [vmem:[%s1028 + $0xc] sm:$0xf]
    %v1033 = vld [vmem:[#allocation2] sm:$0xff]
    %v1038 = vunpack.c.l.b16 %v1029
    %v1039 = vunpack.c.l.b16 %v1030
    %v1040 = vunpack.c.l.b16 %v1031
    %v1041 = vunpack.c.l.b16 %v1032
    %v1042 = vpack.c.b16 %v1039, %v1038
    %v1043 = vpack.c.b16 %v1041, %v1040
    %1046 = vmatprep.subr.bf16.mxu0 0
    %1047 = vmatpush1.bf16.msra.mxu0 0
    %1048 = vmatprep.subr.bf16.mxu0 0
    %1049 = vmatpush1.bf16.msra.mxu0 0
    %1050 = vmatprep.subr.bf16.mxu0 0
    %1051 = vmatpush1.bf16.msra.mxu0 0
    %1052 = vmatprep.subr.bf16.mxu0 0
    %1053 = vmatpush1.bf16.msra.mxu0 0
    %1054 = vmatprep.subr.bf16.mxu0 0
    %1055 = vmatpush1.bf16.msra.mxu0 0
    %1056 = vmatprep.subr.bf16.mxu0 0
    %1057 = vmatpush1.bf16.msra.mxu0 0
    %1058 = vmatprep.subr.bf16.mxu0 0
    %1059 = vmatpush1.bf16.msra.mxu0 %v1043
    %1060 = vmatprep.subr.bf16.mxu0 0
    %1061 = vmatpush1.bf16.msra.mxu0 %v1042
    %1062 = vmatprep.subr.bf16.mxu0 0
    %1063 = vmatpush2.bf16.msra.mxu0 0
    %1064 = vmatprep.subr.bf16.mxu0 0
    %1065 = vmatpush2.bf16.msra.mxu0 0
    %1066 = vmatprep.subr.bf16.mxu0 0
    %1067 = vmatpush2.bf16.msra.mxu0 0
    %1068 = vmatprep.subr.bf16.mxu0 0
    %1069 = vmatpush2.bf16.msra.mxu0 0
    %1070 = vmatprep.subr.bf16.mxu0 0
    %1071 = vmatpush2.bf16.msra.mxu0 0
    %1072 = vmatprep.subr.bf16.mxu0 0
    %1073 = vmatpush2.bf16.msra.mxu0 0
    %1074 = vmatprep.subr.bf16.mxu0 0
    %1075 = vmatpush2.bf16.msra.mxu0 0
    %1076 = vmatprep.subr.bf16.mxu0 0
    %1077 = vmatpush2.bf16.msra.mxu0 0
    %1078 = vmatprep.mubr.bf16.mxu0 0
    %1079 = vmatmul.mubr.bf16.gmra.mxu0 %v171
    %v1080 = vpop.f32.mrf.mxu0
    %v1081 = vadd.f32 0.0, %v1080
    %v1082 = vpop.f32.mrf.mxu0
    %v1083 = vpop.f32.mrf.mxu0
    %v1084 = vpop.f32.mrf.mxu0
    %1085 = vdwg.mxu0
    %v1086 = vadd.f32 %v1033, %v1081
    %v1087 = vxor.u32 %v1086, 2147483648
    %v1088 = vmul.f32 %v1087, 1.442695
    %v1089 = vpow.pop %v1088
    %v1090 = vadd.f32 %v1089, 1.0
    %v1091 = vrcp.pop %v1090
    %v1092 = vmul.f32 1.0, %v1091
    %v1093 = vtanh.pop %v1086
    %v1094 = vmul.f32 %v1092, 0.0
    %1096 = vrot.lane.b32.xlu0 %v1093, 32
    %v1097 = vpop.permute.xlu0 %1096
    %v1099 = vmul.f32 %v1092, %v1097
    %1101 = vrot.lane.b32.xlu0 %v1099, 32
    %v1102 = vpop.permute.xlu0 %1101
    %v1104 = vadd.f32 %v1094, %v1102
    %v1105 = vtanh.pop %v1104
    %1107 = vrot.lane.b32.xlu0 %v1105, 32
    %v1108 = vpop.permute.xlu0 %1107
    %v1110 = vmul.f32 %v1092, %v1108
    %v1111 = vld [vmem:[%s1] sm:$0xff]
    %vm1112 = vcmp.gt.f32.partialorder %v1111, 0.0
    %1114 = vrot.lane.b32.xlu0 %v1110, 64
    %v1115 = vpop.permute.xlu0 %1114
    %v1117 = vsel %vm1112, %v1115, 0.0
    %1119 = vrot.lane.b32.xlu0 %v1104, 96
    %v1120 = vpop.permute.xlu0 %1119
    %v1122 = vsel %vm1112, %v1120, 0.0
    %1123 = vst.msk [vmem:[%s4] sm:$0xff] %vm67, %v1117
    %v1124 = vld [vmem:[%s253] sm:$0xff]
    %v1125 = vpack.c.bf16 %v1117, %v1117
    %v1127 = vsel %vm67, %v1125, 0
    %1129 = vmatprep.subr.bf16.mxu0 0
    %1130 = vmatpush1.bf16.msra.mxu0 0
    %1131 = vmatprep.subr.bf16.mxu0 0
    %1132 = vmatpush1.bf16.msra.mxu0 0
    %1133 = vmatprep.subr.bf16.mxu0 0
    %1134 = vmatpush1.bf16.msra.mxu0 0
    %1135 = vmatprep.subr.bf16.mxu0 0
    %1136 = vmatpush1.bf16.msra.mxu0 0
    %1137 = vmatprep.subr.bf16.mxu0 0
    %1138 = vmatpush1.bf16.msra.mxu0 0
    %1139 = vmatprep.subr.bf16.mxu0 0
    %1140 = vmatpush1.bf16.msra.mxu0 0
    %1141 = vmatprep.subr.bf16.mxu0 0
    %1142 = vmatpush1.bf16.msra.mxu0 %v1043
    %1143 = vmatprep.subr.bf16.mxu0 0
    %1144 = vmatpush1.bf16.msra.mxu0 %v1042
    %1145 = vmatprep.subr.bf16.mxu0 0
    %1146 = vmatpush2.bf16.msra.mxu0 0
    %1147 = vmatprep.subr.bf16.mxu0 0
    %1148 = vmatpush2.bf16.msra.mxu0 0
    %1149 = vmatprep.subr.bf16.mxu0 0
    %1150 = vmatpush2.bf16.msra.mxu0 0
    %1151 = vmatprep.subr.bf16.mxu0 0
    %1152 = vmatpush2.bf16.msra.mxu0 0
    %1153 = vmatprep.subr.bf16.mxu0 0
    %1154 = vmatpush2.bf16.msra.mxu0 0
    %1155 = vmatprep.subr.bf16.mxu0 0
    %1156 = vmatpush2.bf16.msra.mxu0 0
    %1157 = vmatprep.subr.bf16.mxu0 0
    %1158 = vmatpush2.bf16.msra.mxu0 0
    %1159 = vmatprep.subr.bf16.mxu0 0
    %1160 = vmatpush2.bf16.msra.mxu0 0
    %1161 = vmatprep.mubr.bf16.mxu0 0
    %1162 = vmatmul.mubr.bf16.gmra.mxu0 %v1127
    %v1163 = vpop.f32.mrf.mxu0
    %v1164 = vadd.f32 0.0, %v1163
    %v1165 = vpop.f32.mrf.mxu0
    %v1166 = vpop.f32.mrf.mxu0
    %v1167 = vpop.f32.mrf.mxu0
    %1168 = vdwg.mxu0
    %v1169 = vadd.f32 %v1124, %v1164
    %v1170 = vxor.u32 %v1169, 2147483648
    %v1171 = vmul.f32 %v1170, 1.442695
    %v1172 = vpow.pop %v1171
    %v1173 = vadd.f32 %v1172, 1.0
    %v1174 = vrcp.pop %v1173
    %v1175 = vmul.f32 1.0, %v1174
    %v1176 = vtanh.pop %v1169
    %1178 = vrot.lane.b32.xlu0 %v1122, 32
    %v1179 = vpop.permute.xlu0 %1178
    %v1181 = vmul.f32 %v1175, %v1179
    %1183 = vrot.lane.b32.xlu0 %v1176, 32
    %v1184 = vpop.permute.xlu0 %1183
    %v1186 = vmul.f32 %v1175, %v1184
    %1188 = vrot.lane.b32.xlu0 %v1186, 32
    %v1189 = vpop.permute.xlu0 %1188
    %v1191 = vadd.f32 %v1181, %v1189
    %v1192 = vtanh.pop %v1191
    %1194 = vrot.lane.b32.xlu0 %v1192, 32
    %v1195 = vpop.permute.xlu0 %1194
    %v1197 = vmul.f32 %v1175, %v1195
    %v1198 = vld [vmem:[%s327] sm:$0xff]
    %vm1199 = vcmp.gt.f32.partialorder %v1198, 0.0
    %1201 = vrot.lane.b32.xlu0 %v1197, 64
    %v1202 = vpop.permute.xlu0 %1201
    %v1204 = vsel %vm1199, %v1202, %v1117
    %1206 = vrot.lane.b32.xlu0 %v1191, 96
    %v1207 = vpop.permute.xlu0 %1206
    %v1209 = vsel %vm1199, %v1207, %v1122
    %v1210 = vsel %vm1199, %v1202, 0.0
    %s1211 = scalar_lea.vmem %s4, 8
    %1212 = vst.msk [vmem:[%s1211] sm:$0xff] %vm67, %v1210
    %v1213 = vld [vmem:[%s344] sm:$0xff]
    %v1214 = vpack.c.bf16 %v1204, %v1204
    %v1216 = vsel %vm67, %v1214, 0
    %1218 = vmatprep.subr.bf16.mxu0 0
    %1219 = vmatpush1.bf16.msra.mxu0 0
    %1220 = vmatprep.subr.bf16.mxu0 0
    %1221 = vmatpush1.bf16.msra.mxu0 0
    %1222 = vmatprep.subr.bf16.mxu0 0
    %1223 = vmatpush1.bf16.msra.mxu0 0
    %1224 = vmatprep.subr.bf16.mxu0 0
    %1225 = vmatpush1.bf16.msra.mxu0 0
    %1226 = vmatprep.subr.bf16.mxu0 0
    %1227 = vmatpush1.bf16.msra.mxu0 0
    %1228 = vmatprep.subr.bf16.mxu0 0
    %1229 = vmatpush1.bf16.msra.mxu0 0
    %1230 = vmatprep.subr.bf16.mxu0 0
    %1231 = vmatpush1.bf16.msra.mxu0 %v1043
    %1232 = vmatprep.subr.bf16.mxu0 0
    %1233 = vmatpush1.bf16.msra.mxu0 %v1042
    %1234 = vmatprep.subr.bf16.mxu0 0
    %1235 = vmatpush2.bf16.msra.mxu0 0
    %1236 = vmatprep.subr.bf16.mxu0 0
    %1237 = vmatpush2.bf16.msra.mxu0 0
    %1238 = vmatprep.subr.bf16.mxu0 0
    %1239 = vmatpush2.bf16.msra.mxu0 0
    %1240 = vmatprep.subr.bf16.mxu0 0
    %1241 = vmatpush2.bf16.msra.mxu0 0
    %1242 = vmatprep.subr.bf16.mxu0 0
    %1243 = vmatpush2.bf16.msra.mxu0 0
    %1244 = vmatprep.subr.bf16.mxu0 0
    %1245 = vmatpush2.bf16.msra.mxu0 0
    %1246 = vmatprep.subr.bf16.mxu0 0
    %1247 = vmatpush2.bf16.msra.mxu0 0
    %1248 = vmatprep.subr.bf16.mxu0 0
    %1249 = vmatpush2.bf16.msra.mxu0 0
    %1250 = vmatprep.mubr.bf16.mxu0 0
    %1251 = vmatmul.mubr.bf16.gmra.mxu0 %v1216
    %v1252 = vpop.f32.mrf.mxu0
    %v1253 = vadd.f32 0.0, %v1252
    %v1254 = vpop.f32.mrf.mxu0
    %v1255 = vpop.f32.mrf.mxu0
    %v1256 = vpop.f32.mrf.mxu0
    %1257 = vdwg.mxu0
    %v1258 = vadd.f32 %v1213, %v1253
    %v1259 = vxor.u32 %v1258, 2147483648
    %v1260 = vmul.f32 %v1259, 1.442695
    %v1261 = vpow.pop %v1260
    %v1262 = vadd.f32 %v1261, 1.0
    %v1263 = vrcp.pop %v1262
    %v1264 = vmul.f32 1.0, %v1263
    %v1265 = vtanh.pop %v1258
    %1267 = vrot.lane.b32.xlu0 %v1209, 32
    %v1268 = vpop.permute.xlu0 %1267
    %v1270 = vmul.f32 %v1264, %v1268
    %1272 = vrot.lane.b32.xlu0 %v1265, 32
    %v1273 = vpop.permute.xlu0 %1272
    %v1275 = vmul.f32 %v1264, %v1273
    %1277 = vrot.lane.b32.xlu0 %v1275, 32
    %v1278 = vpop.permute.xlu0 %1277
    %v1280 = vadd.f32 %v1270, %v1278
    %v1281 = vtanh.pop %v1280
    %1283 = vrot.lane.b32.xlu0 %v1281, 32
    %v1284 = vpop.permute.xlu0 %1283
    %v1286 = vmul.f32 %v1264, %v1284
    %v1287 = vld [vmem:[%s419] sm:$0xff]
    %vm1288 = vcmp.gt.f32.partialorder %v1287, 0.0
    %1290 = vrot.lane.b32.xlu0 %v1286, 64
    %v1291 = vpop.permute.xlu0 %1290
    %v1293 = vsel %vm1288, %v1291, %v1204
    %1295 = vrot.lane.b32.xlu0 %v1280, 96
    %v1296 = vpop.permute.xlu0 %1295
    %v1298 = vsel %vm1288, %v1296, %v1209
    %v1299 = vsel %vm1288, %v1291, 0.0
    %s1300 = scalar_lea.vmem %s4, 16
    %1301 = vst.msk [vmem:[%s1300] sm:$0xff] %vm67, %v1299
    %v1302 = vld [vmem:[%s436] sm:$0xff]
    %v1303 = vpack.c.bf16 %v1293, %v1293
    %v1305 = vsel %vm67, %v1303, 0
    %1307 = vmatprep.subr.bf16.mxu0 0
    %1308 = vmatpush1.bf16.msra.mxu0 0
    %1309 = vmatprep.subr.bf16.mxu0 0
    %1310 = vmatpush1.bf16.msra.mxu0 0
    %1311 = vmatprep.subr.bf16.mxu0 0
    %1312 = vmatpush1.bf16.msra.mxu0 0
    %1313 = vmatprep.subr.bf16.mxu0 0
    %1314 = vmatpush1.bf16.msra.mxu0 0
    %1315 = vmatprep.subr.bf16.mxu0 0
    %1316 = vmatpush1.bf16.msra.mxu0 0
    %1317 = vmatprep.subr.bf16.mxu0 0
    %1318 = vmatpush1.bf16.msra.mxu0 0
    %1319 = vmatprep.subr.bf16.mxu0 0
    %1320 = vmatpush1.bf16.msra.mxu0 %v1043
    %1321 = vmatprep.subr.bf16.mxu0 0
    %1322 = vmatpush1.bf16.msra.mxu0 %v1042
    %1323 = vmatprep.subr.bf16.mxu0 0
    %1324 = vmatpush2.bf16.msra.mxu0 0
    %1325 = vmatprep.subr.bf16.mxu0 0
    %1326 = vmatpush2.bf16.msra.mxu0 0
    %1327 = vmatprep.subr.bf16.mxu0 0
    %1328 = vmatpush2.bf16.msra.mxu0 0
    %1329 = vmatprep.subr.bf16.mxu0 0
    %1330 = vmatpush2.bf16.msra.mxu0 0
    %1331 = vmatprep.subr.bf16.mxu0 0
    %1332 = vmatpush2.bf16.msra.mxu0 0
    %1333 = vmatprep.subr.bf16.mxu0 0
    %1334 = vmatpush2.bf16.msra.mxu0 0
    %1335 = vmatprep.subr.bf16.mxu0 0
    %1336 = vmatpush2.bf16.msra.mxu0 0
    %1337 = vmatprep.subr.bf16.mxu0 0
    %1338 = vmatpush2.bf16.msra.mxu0 0
    %1339 = vmatprep.mubr.bf16.mxu0 0
    %1340 = vmatmul.mubr.bf16.gmra.mxu0 %v1305
    %v1341 = vpop.f32.mrf.mxu0
    %v1342 = vadd.f32 0.0, %v1341
    %v1343 = vpop.f32.mrf.mxu0
    %v1344 = vpop.f32.mrf.mxu0
    %v1345 = vpop.f32.mrf.mxu0
    %1346 = vdwg.mxu0
    %v1347 = vadd.f32 %v1302, %v1342
    %v1348 = vxor.u32 %v1347, 2147483648
    %v1349 = vmul.f32 %v1348, 1.442695
    %v1350 = vpow.pop %v1349
    %v1351 = vadd.f32 %v1350, 1.0
    %v1352 = vrcp.pop %v1351
    %v1353 = vmul.f32 1.0, %v1352
    %v1354 = vtanh.pop %v1347
    %1356 = vrot.lane.b32.xlu0 %v1298, 32
    %v1357 = vpop.permute.xlu0 %1356
    %v1359 = vmul.f32 %v1353, %v1357
    %1361 = vrot.lane.b32.xlu0 %v1354, 32
    %v1362 = vpop.permute.xlu0 %1361
    %v1364 = vmul.f32 %v1353, %v1362
    %1366 = vrot.lane.b32.xlu0 %v1364, 32
    %v1367 = vpop.permute.xlu0 %1366
    %v1369 = vadd.f32 %v1359, %v1367
    %v1370 = vtanh.pop %v1369
    %1372 = vrot.lane.b32.xlu0 %v1370, 32
    %v1373 = vpop.permute.xlu0 %1372
    %v1375 = vmul.f32 %v1353, %v1373
    %v1376 = vld [vmem:[%s511] sm:$0xff]
    %vm1377 = vcmp.gt.f32.partialorder %v1376, 0.0
    %1379 = vrot.lane.b32.xlu0 %v1375, 64
    %v1380 = vpop.permute.xlu0 %1379
    %v1382 = vsel %vm1377, %v1380, %v1293
    %1384 = vrot.lane.b32.xlu0 %v1369, 96
    %v1385 = vpop.permute.xlu0 %1384
    %v1387 = vsel %vm1377, %v1385, %v1298
    %v1388 = vsel %vm1377, %v1380, 0.0
    %s1389 = scalar_lea.vmem %s4, 24
    %1390 = vst.msk [vmem:[%s1389] sm:$0xff] %vm67, %v1388
    %v1391 = vld [vmem:[%s528] sm:$0xff]
    %v1392 = vpack.c.bf16 %v1382, %v1382
    %v1394 = vsel %vm67, %v1392, 0
    %1396 = vmatprep.subr.bf16.mxu0 0
    %1397 = vmatpush1.bf16.msra.mxu0 0
    %1398 = vmatprep.subr.bf16.mxu0 0
    %1399 = vmatpush1.bf16.msra.mxu0 0
    %1400 = vmatprep.subr.bf16.mxu0 0
    %1401 = vmatpush1.bf16.msra.mxu0 0
    %1402 = vmatprep.subr.bf16.mxu0 0
    %1403 = vmatpush1.bf16.msra.mxu0 0
    %1404 = vmatprep.subr.bf16.mxu0 0
    %1405 = vmatpush1.bf16.msra.mxu0 0
    %1406 = vmatprep.subr.bf16.mxu0 0
    %1407 = vmatpush1.bf16.msra.mxu0 0
    %1408 = vmatprep.subr.bf16.mxu0 0
    %1409 = vmatpush1.bf16.msra.mxu0 %v1043
    %1410 = vmatprep.subr.bf16.mxu0 0
    %1411 = vmatpush1.bf16.msra.mxu0 %v1042
    %1412 = vmatprep.subr.bf16.mxu0 0
    %1413 = vmatpush2.bf16.msra.mxu0 0
    %1414 = vmatprep.subr.bf16.mxu0 0
    %1415 = vmatpush2.bf16.msra.mxu0 0
    %1416 = vmatprep.subr.bf16.mxu0 0
    %1417 = vmatpush2.bf16.msra.mxu0 0
    %1418 = vmatprep.subr.bf16.mxu0 0
    %1419 = vmatpush2.bf16.msra.mxu0 0
    %1420 = vmatprep.subr.bf16.mxu0 0
    %1421 = vmatpush2.bf16.msra.mxu0 0
    %1422 = vmatprep.subr.bf16.mxu0 0
    %1423 = vmatpush2.bf16.msra.mxu0 0
    %1424 = vmatprep.subr.bf16.mxu0 0
    %1425 = vmatpush2.bf16.msra.mxu0 0
    %1426 = vmatprep.subr.bf16.mxu0 0
    %1427 = vmatpush2.bf16.msra.mxu0 0
    %1428 = vmatprep.mubr.bf16.mxu0 0
    %1429 = vmatmul.mubr.bf16.gmra.mxu0 %v1394
    %v1430 = vpop.f32.mrf.mxu0
    %v1431 = vadd.f32 0.0, %v1430
    %v1432 = vpop.f32.mrf.mxu0
    %v1433 = vpop.f32.mrf.mxu0
    %v1434 = vpop.f32.mrf.mxu0
    %1435 = vdwg.mxu0
    %v1436 = vadd.f32 %v1391, %v1431
    %v1437 = vxor.u32 %v1436, 2147483648
    %v1438 = vmul.f32 %v1437, 1.442695
    %v1439 = vpow.pop %v1438
    %v1440 = vadd.f32 %v1439, 1.0
    %v1441 = vrcp.pop %v1440
    %v1442 = vmul.f32 1.0, %v1441
    %v1443 = vtanh.pop %v1436
    %1445 = vrot.lane.b32.xlu0 %v1387, 32
    %v1446 = vpop.permute.xlu0 %1445
    %v1448 = vmul.f32 %v1442, %v1446
    %1450 = vrot.lane.b32.xlu0 %v1443, 32
    %v1451 = vpop.permute.xlu0 %1450
    %v1453 = vmul.f32 %v1442, %v1451
    %1455 = vrot.lane.b32.xlu0 %v1453, 32
    %v1456 = vpop.permute.xlu0 %1455
    %v1458 = vadd.f32 %v1448, %v1456
    %v1459 = vtanh.pop %v1458
    %1461 = vrot.lane.b32.xlu0 %v1459, 32
    %v1462 = vpop.permute.xlu0 %1461
    %v1464 = vmul.f32 %v1442, %v1462
    %v1465 = vld [vmem:[%s603] sm:$0xff]
    %vm1466 = vcmp.gt.f32.partialorder %v1465, 0.0
    %1468 = vrot.lane.b32.xlu0 %v1464, 64
    %v1469 = vpop.permute.xlu0 %1468
    %v1471 = vsel %vm1466, %v1469, %v1382
    %1473 = vrot.lane.b32.xlu0 %v1458, 96
    %v1474 = vpop.permute.xlu0 %1473
    %v1476 = vsel %vm1466, %v1474, %v1387
    %v1477 = vsel %vm1466, %v1469, 0.0
    %s1478 = scalar_lea.vmem %s4, 32
    %1479 = vst.msk [vmem:[%s1478] sm:$0xff] %vm67, %v1477
    %v1480 = vld [vmem:[%s620] sm:$0xff]
    %v1481 = vpack.c.bf16 %v1471, %v1471
    %v1483 = vsel %vm67, %v1481, 0
    %1485 = vmatprep.subr.bf16.mxu0 0
    %1486 = vmatpush1.bf16.msra.mxu0 0
    %1487 = vmatprep.subr.bf16.mxu0 0
    %1488 = vmatpush1.bf16.msra.mxu0 0
    %1489 = vmatprep.subr.bf16.mxu0 0
    %1490 = vmatpush1.bf16.msra.mxu0 0
    %1491 = vmatprep.subr.bf16.mxu0 0
    %1492 = vmatpush1.bf16.msra.mxu0 0
    %1493 = vmatprep.subr.bf16.mxu0 0
    %1494 = vmatpush1.bf16.msra.mxu0 0
    %1495 = vmatprep.subr.bf16.mxu0 0
    %1496 = vmatpush1.bf16.msra.mxu0 0
    %1497 = vmatprep.subr.bf16.mxu0 0
    %1498 = vmatpush1.bf16.msra.mxu0 %v1043
    %1499 = vmatprep.subr.bf16.mxu0 0
    %1500 = vmatpush1.bf16.msra.mxu0 %v1042
    %1501 = vmatprep.subr.bf16.mxu0 0
    %1502 = vmatpush2.bf16.msra.mxu0 0
    %1503 = vmatprep.subr.bf16.mxu0 0
    %1504 = vmatpush2.bf16.msra.mxu0 0
    %1505 = vmatprep.subr.bf16.mxu0 0
    %1506 = vmatpush2.bf16.msra.mxu0 0
    %1507 = vmatprep.subr.bf16.mxu0 0
    %1508 = vmatpush2.bf16.msra.mxu0 0
    %1509 = vmatprep.subr.bf16.mxu0 0
    %1510 = vmatpush2.bf16.msra.mxu0 0
    %1511 = vmatprep.subr.bf16.mxu0 0
    %1512 = vmatpush2.bf16.msra.mxu0 0
    %1513 = vmatprep.subr.bf16.mxu0 0
    %1514 = vmatpush2.bf16.msra.mxu0 0
    %1515 = vmatprep.subr.bf16.mxu0 0
    %1516 = vmatpush2.bf16.msra.mxu0 0
    %1517 = vmatprep.mubr.bf16.mxu0 0
    %1518 = vmatmul.mubr.bf16.gmra.mxu0 %v1483
    %v1519 = vpop.f32.mrf.mxu0
    %v1520 = vadd.f32 0.0, %v1519
    %v1521 = vpop.f32.mrf.mxu0
    %v1522 = vpop.f32.mrf.mxu0
    %v1523 = vpop.f32.mrf.mxu0
    %1524 = vdwg.mxu0
    %v1525 = vadd.f32 %v1480, %v1520
    %v1526 = vxor.u32 %v1525, 2147483648
    %v1527 = vmul.f32 %v1526, 1.442695
    %v1528 = vpow.pop %v1527
    %v1529 = vadd.f32 %v1528, 1.0
    %v1530 = vrcp.pop %v1529
    %v1531 = vmul.f32 1.0, %v1530
    %v1532 = vtanh.pop %v1525
    %1534 = vrot.lane.b32.xlu0 %v1476, 32
    %v1535 = vpop.permute.xlu0 %1534
    %v1537 = vmul.f32 %v1531, %v1535
    %1539 = vrot.lane.b32.xlu0 %v1532, 32
    %v1540 = vpop.permute.xlu0 %1539
    %v1542 = vmul.f32 %v1531, %v1540
    %1544 = vrot.lane.b32.xlu0 %v1542, 32
    %v1545 = vpop.permute.xlu0 %1544
    %v1547 = vadd.f32 %v1537, %v1545
    %v1548 = vtanh.pop %v1547
    %1550 = vrot.lane.b32.xlu0 %v1548, 32
    %v1551 = vpop.permute.xlu0 %1550
    %v1553 = vmul.f32 %v1531, %v1551
    %v1554 = vld [vmem:[%s695] sm:$0xff]
    %vm1555 = vcmp.gt.f32.partialorder %v1554, 0.0
    %1557 = vrot.lane.b32.xlu0 %v1553, 64
    %v1558 = vpop.permute.xlu0 %1557
    %v1560 = vsel %vm1555, %v1558, %v1471
    %1562 = vrot.lane.b32.xlu0 %v1547, 96
    %v1563 = vpop.permute.xlu0 %1562
    %v1565 = vsel %vm1555, %v1563, %v1476
    %v1566 = vsel %vm1555, %v1558, 0.0
    %s1567 = scalar_lea.vmem %s4, 40
    %1568 = vst.msk [vmem:[%s1567] sm:$0xff] %vm67, %v1566
    %v1569 = vld [vmem:[%s712] sm:$0xff]
    %v1570 = vpack.c.bf16 %v1560, %v1560
    %v1572 = vsel %vm67, %v1570, 0
    %1574 = vmatprep.subr.bf16.mxu0 0
    %1575 = vmatpush1.bf16.msra.mxu0 0
    %1576 = vmatprep.subr.bf16.mxu0 0
    %1577 = vmatpush1.bf16.msra.mxu0 0
    %1578 = vmatprep.subr.bf16.mxu0 0
    %1579 = vmatpush1.bf16.msra.mxu0 0
    %1580 = vmatprep.subr.bf16.mxu0 0
    %1581 = vmatpush1.bf16.msra.mxu0 0
    %1582 = vmatprep.subr.bf16.mxu0 0
    %1583 = vmatpush1.bf16.msra.mxu0 0
    %1584 = vmatprep.subr.bf16.mxu0 0
    %1585 = vmatpush1.bf16.msra.mxu0 0
    %1586 = vmatprep.subr.bf16.mxu0 0
    %1587 = vmatpush1.bf16.msra.mxu0 %v1043
    %1588 = vmatprep.subr.bf16.mxu0 0
    %1589 = vmatpush1.bf16.msra.mxu0 %v1042
    %1590 = vmatprep.subr.bf16.mxu0 0
    %1591 = vmatpush2.bf16.msra.mxu0 0
    %1592 = vmatprep.subr.bf16.mxu0 0
    %1593 = vmatpush2.bf16.msra.mxu0 0
    %1594 = vmatprep.subr.bf16.mxu0 0
    %1595 = vmatpush2.bf16.msra.mxu0 0
    %1596 = vmatprep.subr.bf16.mxu0 0
    %1597 = vmatpush2.bf16.msra.mxu0 0
    %1598 = vmatprep.subr.bf16.mxu0 0
    %1599 = vmatpush2.bf16.msra.mxu0 0
    %1600 = vmatprep.subr.bf16.mxu0 0
    %1601 = vmatpush2.bf16.msra.mxu0 0
    %1602 = vmatprep.subr.bf16.mxu0 0
    %1603 = vmatpush2.bf16.msra.mxu0 0
    %1604 = vmatprep.subr.bf16.mxu0 0
    %1605 = vmatpush2.bf16.msra.mxu0 0
    %1606 = vmatprep.mubr.bf16.mxu0 0
    %1607 = vmatmul.mubr.bf16.gmra.mxu0 %v1572
    %v1608 = vpop.f32.mrf.mxu0
    %v1609 = vadd.f32 0.0, %v1608
    %v1610 = vpop.f32.mrf.mxu0
    %v1611 = vpop.f32.mrf.mxu0
    %v1612 = vpop.f32.mrf.mxu0
    %1613 = vdwg.mxu0
    %v1614 = vadd.f32 %v1569, %v1609
    %v1615 = vxor.u32 %v1614, 2147483648
    %v1616 = vmul.f32 %v1615, 1.442695
    %v1617 = vpow.pop %v1616
    %v1618 = vadd.f32 %v1617, 1.0
    %v1619 = vrcp.pop %v1618
    %v1620 = vmul.f32 1.0, %v1619
    %v1621 = vtanh.pop %v1614
    %1623 = vrot.lane.b32.xlu0 %v1565, 32
    %v1624 = vpop.permute.xlu0 %1623
    %v1626 = vmul.f32 %v1620, %v1624
    %1628 = vrot.lane.b32.xlu0 %v1621, 32
    %v1629 = vpop.permute.xlu0 %1628
    %v1631 = vmul.f32 %v1620, %v1629
    %1633 = vrot.lane.b32.xlu0 %v1631, 32
    %v1634 = vpop.permute.xlu0 %1633
    %v1636 = vadd.f32 %v1626, %v1634
    %v1637 = vtanh.pop %v1636
    %1639 = vrot.lane.b32.xlu0 %v1637, 32
    %v1640 = vpop.permute.xlu0 %1639
    %v1642 = vmul.f32 %v1620, %v1640
    %v1643 = vld [vmem:[%s787] sm:$0xff]
    %vm1644 = vcmp.gt.f32.partialorder %v1643, 0.0
    %1646 = vrot.lane.b32.xlu0 %v1642, 64
    %v1647 = vpop.permute.xlu0 %1646
    %v1649 = vsel %vm1644, %v1647, %v1560
    %1651 = vrot.lane.b32.xlu0 %v1636, 96
    %v1652 = vpop.permute.xlu0 %1651
    %v1654 = vsel %vm1644, %v1652, %v1565
    %v1655 = vsel %vm1644, %v1647, 0.0
    %s1656 = scalar_lea.vmem %s4, 48
    %1657 = vst.msk [vmem:[%s1656] sm:$0xff] %vm67, %v1655
    %v1658 = vld [vmem:[%s804] sm:$0xff]
    %v1659 = vpack.c.bf16 %v1649, %v1649
    %v1661 = vsel %vm67, %v1659, 0
    %1663 = vmatprep.subr.bf16.mxu0 0
    %1664 = vmatpush1.bf16.msra.mxu0 0
    %1665 = vmatprep.subr.bf16.mxu0 0
    %1666 = vmatpush1.bf16.msra.mxu0 0
    %1667 = vmatprep.subr.bf16.mxu0 0
    %1668 = vmatpush1.bf16.msra.mxu0 0
    %1669 = vmatprep.subr.bf16.mxu0 0
    %1670 = vmatpush1.bf16.msra.mxu0 0
    %1671 = vmatprep.subr.bf16.mxu0 0
    %1672 = vmatpush1.bf16.msra.mxu0 0
    %1673 = vmatprep.subr.bf16.mxu0 0
    %1674 = vmatpush1.bf16.msra.mxu0 0
    %1675 = vmatprep.subr.bf16.mxu0 0
    %1676 = vmatpush1.bf16.msra.mxu0 %v1043
    %1677 = vmatprep.subr.bf16.mxu0 0
    %1678 = vmatpush1.bf16.msra.mxu0 %v1042
    %1679 = vmatprep.subr.bf16.mxu0 0
    %1680 = vmatpush2.bf16.msra.mxu0 0
    %1681 = vmatprep.subr.bf16.mxu0 0
    %1682 = vmatpush2.bf16.msra.mxu0 0
    %1683 = vmatprep.subr.bf16.mxu0 0
    %1684 = vmatpush2.bf16.msra.mxu0 0
    %1685 = vmatprep.subr.bf16.mxu0 0
    %1686 = vmatpush2.bf16.msra.mxu0 0
    %1687 = vmatprep.subr.bf16.mxu0 0
    %1688 = vmatpush2.bf16.msra.mxu0 0
    %1689 = vmatprep.subr.bf16.mxu0 0
    %1690 = vmatpush2.bf16.msra.mxu0 0
    %1691 = vmatprep.subr.bf16.mxu0 0
    %1692 = vmatpush2.bf16.msra.mxu0 0
    %1693 = vmatprep.subr.bf16.mxu0 0
    %1694 = vmatpush2.bf16.msra.mxu0 0
    %1695 = vmatprep.mubr.bf16.mxu0 0
    %1696 = vmatmul.mubr.bf16.gmra.mxu0 %v1661
    %v1697 = vpop.f32.mrf.mxu0
    %v1698 = vadd.f32 0.0, %v1697
    %v1699 = vpop.f32.mrf.mxu0
    %v1700 = vpop.f32.mrf.mxu0
    %v1701 = vpop.f32.mrf.mxu0
    %1702 = vdwg.mxu0
    %v1703 = vadd.f32 %v1658, %v1698
    %v1704 = vxor.u32 %v1703, 2147483648
    %v1705 = vmul.f32 %v1704, 1.442695
    %v1706 = vpow.pop %v1705
    %v1707 = vadd.f32 %v1706, 1.0
    %v1708 = vrcp.pop %v1707
    %v1709 = vmul.f32 1.0, %v1708
    %v1710 = vtanh.pop %v1703
    %1712 = vrot.lane.b32.xlu0 %v1654, 32
    %v1713 = vpop.permute.xlu0 %1712
    %v1715 = vmul.f32 %v1709, %v1713
    %1717 = vrot.lane.b32.xlu0 %v1710, 32
    %v1718 = vpop.permute.xlu0 %1717
    %v1720 = vmul.f32 %v1709, %v1718
    %1722 = vrot.lane.b32.xlu0 %v1720, 32
    %v1723 = vpop.permute.xlu0 %1722
    %v1725 = vadd.f32 %v1715, %v1723
    %v1726 = vtanh.pop %v1725
    %1728 = vrot.lane.b32.xlu0 %v1726, 32
    %v1729 = vpop.permute.xlu0 %1728
    %v1731 = vmul.f32 %v1709, %v1729
    %v1732 = vld [vmem:[%s879] sm:$0xff]
    %vm1733 = vcmp.gt.f32.partialorder %v1732, 0.0
    %1735 = vrot.lane.b32.xlu0 %v1731, 64
    %v1736 = vpop.permute.xlu0 %1735
    %v1738 = vsel %vm1733, %v1736, %v1649
    %1740 = vrot.lane.b32.xlu0 %v1725, 96
    %v1741 = vpop.permute.xlu0 %1740
    %v1743 = vsel %vm1733, %v1741, %v1654
    %v1744 = vsel %vm1733, %v1736, 0.0
    %s1745 = scalar_lea.vmem %s4, 56
    %1746 = vst.msk [vmem:[%s1745] sm:$0xff] %vm67, %v1744
    %s1747 = scalar_lea.vmem [#allocation4], 8
    %1748 = vst.msk [vmem:[%s1747] sm:$0xff] %vm67, %v1738
    %s1749 = scalar_lea.vmem [#allocation6], 8
    %1750 = vst.msk [vmem:[%s1749] sm:$0xff] %vm67, %v1743
    // Predicated region
    $region18: #{tpu_custom_call.1} parent=1 // pred_check
      _
    $region19: #{tpu_custom_call.1} parent=1 // pred_check_branch
      %1752 = sbr.rel (0) target = $region21
    $region20: #{tpu_custom_call.1} parent=1 // pred_region
      _
    $region21: #{tpu_custom_call.1} parent=1 // pred_fallthru
      _
    // Predicated region
    $region22: #{tpu_custom_call.1} parent=1 // pred_check
      _
    $region23: #{tpu_custom_call.1} parent=1 // pred_check_branch
      %1754 = sbr.rel (0) target = $region25
    $region24: #{tpu_custom_call.1} parent=1 // pred_region
      %s1756 = ssub.s32 256, 256
      %1757 = vsyncadd [#allocation5], %s1756
      %s1758 = sshll.u32 [#allocation4], 4
      %s1759 = int_to_ptr.vmem [resolvable:$true] %s1758
      %1764 = dma.vmem_to_hbm [thread:$0]  %s1759, 256, %s5, [#allocation5], 128, 128, 8
    $region25: #{tpu_custom_call.1} parent=1 // pred_fallthru
      _
    // Predicated region
    $region26: #{tpu_custom_call.1} parent=1 // pred_check
      _
    $region27: #{tpu_custom_call.1} parent=1 // pred_check_branch
      %1766 = sbr.rel (0) target = $region29
    $region28: #{tpu_custom_call.1} parent=1 // pred_region
      %s1768 = ssub.s32 256, 256
      %1769 = vsyncadd [#allocation7], %s1768
      %s1770 = sshll.u32 [#allocation6], 4
      %s1771 = int_to_ptr.vmem [resolvable:$true] %s1770
      %1776 = dma.vmem_to_hbm [thread:$0]  %s1771, 256, %s6, [#allocation7], 128, 128, 8
    $region29: #{tpu_custom_call.1} parent=1 // pred_fallthru
      _
    // Predicated region
    $region30: #{tpu_custom_call.1} parent=1 // pred_check
      _
    $region31: #{tpu_custom_call.1} parent=1 // pred_check_branch
      %1778 = sbr.rel (0) target = $region33
    $region32: #{tpu_custom_call.1} parent=1 // pred_region
      _
    $region33: #{tpu_custom_call.1} parent=1 // pred_fallthru
      _
    // Predicated region
    $region34: #{tpu_custom_call.1} parent=1 // pred_check
      _
    $region35: #{tpu_custom_call.1} parent=1 // pred_check_branch
      %1780 = sbr.rel (0) target = $region37
    $region36: #{tpu_custom_call.1} parent=1 // pred_region
      %1781 = dma.done [#allocation5], 256
    $region37: #{tpu_custom_call.1} parent=1 // pred_fallthru
      _
    // Predicated region
    $region38: #{tpu_custom_call.1} parent=1 // pred_check
      _
    $region39: #{tpu_custom_call.1} parent=1 // pred_check_branch
      %1783 = sbr.rel (0) target = $region41
    $region40: #{tpu_custom_call.1} parent=1 // pred_region
      %1784 = dma.done [#allocation7], 256
    $region41: #{tpu_custom_call.1} parent=1 // pred_fallthru
      _
    %1785 = vsyncpa [#allocation5], 1
    %1786 = vsyncpa [#allocation7], 1

</llo_original>
